<compile_context>
chip_gen: v7x
topology: tpu7x:2x2x1
jax: 0.10.0
libtpu: 0.0.40
codegen_flags: <defaults>
</compile_context>

<pallas_src>
import math
import functools

import jax
import jax.numpy as jnp
from jax.experimental import pallas as pl
from jax.experimental.pallas import tpu as pltpu

LEAKY_SLOPE = 0.2   # nn.LeakyReLU(0.2)
LN_EPS = 1e-5       # nn.LayerNorm default eps


# ---------------------------------------------------------------------------
# small helpers
# ---------------------------------------------------------------------------
def _round_up(x, m):
    return ((x + m - 1) // m) * m


def _leaky_relu(x):
    return jnp.where(x >= 0, x, LEAKY_SLOPE * x)


def _layer_norm(x, gamma, beta):
    """Two-pass LayerNorm (pure-JAX reference)."""
    mu = jnp.mean(x, axis=-1, keepdims=True)
    var = jnp.mean((x - mu) ** 2, axis=-1, keepdims=True)
    return (x - mu) * jax.lax.rsqrt(var + LN_EPS) * gamma + beta


# ---------------------------------------------------------------------------
# Pallas kernel: the full GTLayer stack, grid = (batch_blocks, layers)
# ---------------------------------------------------------------------------
def gt_stack_kernel(h_ref, wmats_ref, wvecs_ref, out_ref, *,
                    nheads, head_dim, dm_real, weights_resident):
    layer = pl.program_id(1)

    # Initialize the resident output block from h at the first layer of this
    # batch block; out_ref's block index is constant along the layer axis, so it
    # stays in VMEM for all layers and is written back to HBM once at the end.
    @pl.when(layer == 0)
    def _():
        out_ref[...] = h_ref[...]

    widx = layer if weights_resident else 0

    bblk, S, Dp = out_ref.shape
    M = bblk * S
    ctx_w = nheads * head_dim

    # Per-layer weights: matrices in bf16 for the MXU, vectors in f32.
    wq = wmats_ref[widx, 0]
    wk = wmats_ref[widx, 1]
    wv = wmats_ref[widx, 2]
    wo = wmats_ref[widx, 3]
    w1 = wmats_ref[widx, 4]
    w2 = wmats_ref[widx, 5]
    vec = wvecs_ref[widx]                       # (8, Dp) f32
    b1, b2 = vec[0:1], vec[1:2]
    g1, be1 = vec[2:3], vec[3:4]
    g2, be2 = vec[4:5], vec[5:6]

    # Lane mask over the real model dim: LayerNorm statistics ignore pad lanes,
    # so padding can never corrupt the normalization (robust by construction).
    lane = jax.lax.broadcasted_iota(jnp.int32, (1, Dp), 1)
    lmask = (lane < dm_real).astype(jnp.float32)
    inv_n = 1.0 / float(dm_real)

    def layer_norm(x, gamma, beta):
        xm = x * lmask
        mu = jnp.sum(xm, axis=-1, keepdims=True) * inv_n
        d = (xm - mu) * lmask
        var = jnp.sum(d * d, axis=-1, keepdims=True) * inv_n
        return d * jax.lax.rsqrt(var + LN_EPS) * gamma + beta

    h = out_ref[...].reshape(M, Dp)             # f32 activations
    h_bf = h.astype(jnp.bfloat16)

    # QKV projections on the flattened batch*seq slab (bf16 operands, f32 accum).
    # The 1/(sqrt(head_dim)*temperature) scale is folded into Wq in the wrapper.
    q = jnp.dot(h_bf, wq, preferred_element_type=jnp.float32).reshape(bblk, S, Dp)
    k = jnp.dot(h_bf, wk, preferred_element_type=jnp.float32).reshape(bblk, S, Dp)
    v = jnp.dot(h_bf, wv, preferred_element_type=jnp.float32).reshape(bblk, S, Dp)

    # Multi-head attention, batched over the batch block per head.
    # (mask is None and dropout_att has p=0 in GT.forward.)
    ctx_heads = []
    for i in range(nheads):                     # static unroll (nheads is tiny)
        sl = slice(i * head_dim, (i + 1) * head_dim)
        qi = q[:, :, sl].astype(jnp.bfloat16)
        ki = k[:, :, sl].astype(jnp.bfloat16)
        vi = v[:, :, sl].astype(jnp.bfloat16)
        s = jnp.einsum("bqd,bkd->bqk", qi, ki, preferred_element_type=jnp.float32)
        s = s - jnp.max(s, axis=-1, keepdims=True)
        p = jnp.exp(s)
        p = p / jnp.sum(p, axis=-1, keepdims=True)          # exact normalization
        ctx_heads.append(jnp.einsum("bqk,bkd->bqd", p.astype(jnp.bfloat16), vi,
                                    preferred_element_type=jnp.float32))
    context = (ctx_heads[0] if nheads == 1
               else jnp.concatenate(ctx_heads, axis=-1)).reshape(M, ctx_w)

    # Output projection on the un-padded context width (pad rows of Wo are zero),
    # LeakyReLU, residual + LN1.
    wo_r = wo if ctx_w == Dp else wo[:ctx_w, :]
    h_sa = _leaky_relu(jnp.dot(context.astype(jnp.bfloat16), wo_r,
                               preferred_element_type=jnp.float32))
    h1 = layer_norm(h_sa + h, g1, be1)

    # FFN: LeakyReLU(h1 @ W1 + b1) @ W2 + b2, residual + LN2.
    hf = _leaky_relu(jnp.dot(h1.astype(jnp.bfloat16), w1,
                             preferred_element_type=jnp.float32) + b1)
    hf = jnp.dot(hf.astype(jnp.bfloat16), w2,
                 preferred_element_type=jnp.float32) + b2
    h2 = layer_norm(h1 + hf, g2, be2)

    out_ref[...] = h2.reshape(bblk, S, Dp)


# ---------------------------------------------------------------------------
# VMEM-aware sizing
# ---------------------------------------------------------------------------
def _vmem_capacity_bytes():
    """Per-core VMEM capacity (128 MiB on v5e/v6e, 64 MiB on v7x), with fallback."""
    try:
        info = pltpu.get_tpu_info()
        for attr in ("vmem_capacity_bytes", "vmem_bytes", "vmem_size_bytes"):
            val = getattr(info, attr, None)
            if val:
                return int(val)
    except Exception:
        pass
    return 64 << 20          # conservative fallback (v7x per-TensorCore)


def _choose_bblk(B, S, Dp, act_budget):
    """Largest divisor of B whose activation working set fits `act_budget`.

    Prefer >= 2 batch blocks whenever B allows so both TensorCores get work on
    v7x megacore (the batch grid axis is 'parallel'), keeping blocks as large as
    possible otherwise.
    """
    per_elem = S * Dp * 4 * 12            # rough per-batch-element working set (bytes)
    divisors = [d for d in range(1, B + 1) if B % d == 0]
    fitting = [d for d in divisors if d * per_elem <= act_budget] or [1]
    best = fitting[-1]
    split = [d for d in fitting if (B // d) >= 2]
    if split:
        good = [d for d in split if d * S >= 128]
        best = (good or split)[-1]
    return best


def gt_layers_forward(h_pad, wmats, wvecs, *, nheads, head_dim, dm_real, bblk=None):
    """Run the full GTLayer stack.

    h_pad: (B, S, Dp) f32, Dp a multiple of 128.
    wmats: (L, 6, Dp, Dp) bf16  stacked [wq*scale, wk, wv, wo, w1, w2]
    wvecs: (L, 8, Dp)     f32   stacked [b1, b2, g1, be1, g2, be2, 0, 0]
    """
    B, S, Dp = h_pad.shape
    L = int(wmats.shape[0])

    vmem_cap = _vmem_capacity_bytes()
    usable = int(vmem_cap * 0.75)          # leave headroom for Mosaic scratch

    w_bytes = int(wmats.size) * wmats.dtype.itemsize \
        + int(wvecs.size) * wvecs.dtype.itemsize
    per_layer_w = w_bytes // L
    weights_resident = w_bytes <= usable // 3
    w_working = w_bytes if weights_resident else 2 * per_layer_w   # 2 = double buffer
    act_budget = max(usable - w_working, 2 << 20)

    if bblk is None:
        bblk = _choose_bblk(B, S, Dp, act_budget)
    nb = B // bblk

    h_map = lambda b, l: (b, 0, 0)          # h / out block: follows the batch axis
    if weights_resident:
        # Full-L block + constant index map: DMA'd once, resident for the whole
        # kernel (no re-streaming of all layers for every batch block).
        wm_spec = pl.BlockSpec(tuple(wmats.shape), lambda b, l: (0, 0, 0, 0))
        wv_spec = pl.BlockSpec(tuple(wvecs.shape), lambda b, l: (0, 0, 0))
    else:
        wm_spec = pl.BlockSpec((1,) + tuple(wmats.shape[1:]), lambda b, l: (l, 0, 0, 0))
        wv_spec = pl.BlockSpec((1,) + tuple(wvecs.shape[1:]), lambda b, l: (l, 0, 0))

    kernel = functools.partial(gt_stack_kernel, nheads=nheads, head_dim=head_dim,
                               dm_real=dm_real, weights_resident=weights_resident)

    flops = 2 * B * S * Dp * Dp * 6 * L + 4 * B * S * S * nheads * head_dim * L
    transc = B * nheads * S * S * L
    bytes_acc = w_bytes * (1 if weights_resident else nb) + 2 * B * S * Dp * 4

    return pl.pallas_call(
        kernel,
        grid=(nb, L),
        in_specs=[pl.BlockSpec((bblk, S, Dp), h_map), wm_spec, wv_spec],
        out_specs=pl.BlockSpec((bblk, S, Dp), h_map),
        out_shape=jax.ShapeDtypeStruct((B, S, Dp), jnp.float32),
        compiler_params=pltpu.CompilerParams(
            dimension_semantics=("parallel", "arbitrary"),
            vmem_limit_bytes=usable),
        cost_estimate=pl.CostEstimate(flops=int(flops),
                                      transcendentals=int(transc),
                                      bytes_accessed=int(bytes_acc)),
    )(h_pad, wmats, wvecs)


# ---------------------------------------------------------------------------
# Weight padding / packing (done once in the wrapper)
# ---------------------------------------------------------------------------
def _pad_to(x, rows, cols):
    r, c = x.shape
    return jnp.pad(x, ((0, rows - r), (0, cols - c)))


def _pad_vec(x, cols):
    x = jnp.asarray(x).reshape(-1)
    return jnp.pad(x, (0, cols - x.shape[0]))


def stack_layer_params(layer_params, Dm, Dp, nheads, temperature):
    """Pack per-layer weights into two stacked tensors.

    Matrices go to bf16 (MXU operands); biases/gammas/betas stay f32.  Every
    tensor is zero-padded to the 128-multiple model dim; the attention scale
    1/(sqrt(head_dim)*temperature) is folded into Wq.
    """
    hd = Dm // nheads
    scale = 1.0 / (math.sqrt(hd) * temperature)
    mats, vecs = [], []
    for p in layer_params:
        mats.append(jnp.stack([
            _pad_to(p["wq"] * scale, Dp, Dp),
            _pad_to(p["wk"], Dp, Dp),
            _pad_to(p["wv"], Dp, Dp),
            _pad_to(p["wo"], Dp, Dp),
            _pad_to(p["w1"], Dp, Dp),
            _pad_to(p["w2"], Dp, Dp),
        ]))
        vecs.append(jnp.stack([
            _pad_vec(p["b1"], Dp), _pad_vec(p["b2"], Dp),
            _pad_vec(p["g1"], Dp), _pad_vec(p["be1"], Dp),
            _pad_vec(p["g2"], Dp), _pad_vec(p["be2"], Dp),
            jnp.zeros((Dp,), jnp.float32), jnp.zeros((Dp,), jnp.float32),
        ]))
    wmats = jnp.stack(mats).astype(jnp.bfloat16)      # (L, 6, Dp, Dp)
    wvecs = jnp.stack(vecs).astype(jnp.float32)       # (L, 8, Dp)
    return wmats, wvecs


# ---------------------------------------------------------------------------
# Pure-JAX reference for one GTLayer (mirrors the PyTorch forward) — for checking
# ---------------------------------------------------------------------------
def gt_layer_ref(h, p, *, nheads, temperature):
    B, S, Dm = h.shape
    hd = Dm // nheads
    q = h @ p["wq"]; k = h @ p["wk"]; v = h @ p["wv"]
    q_ = q.reshape(B, S, nheads, hd).transpose(0, 2, 1, 3)
    k_ = k.reshape(B, S, nheads, hd).transpose(0, 2, 1, 3)
    v_ = v.reshape(B, S, nheads, hd).transpose(0, 2, 1, 3)
    score = jnp.einsum("bhsd,bhtd->bhst", q_, k_) / math.sqrt(hd)
    att = jax.nn.softmax(score / temperature, axis=-1)
    ctx = jnp.einsum("bhst,bhtd->bhsd", att, v_)
    ctx = ctx.transpose(0, 2, 1, 3).reshape(B, S, Dm)
    h_sa = _leaky_relu(ctx @ p["wo"])
    h1 = _layer_norm(h_sa + h, p["g1"], p["be1"])
    hf = _leaky_relu(h1 @ p["w1"] + p["b1"])
    hf = hf @ p["w2"] + p["b2"]
    return _layer_norm(h1 + hf, p["g2"], p["be2"])


# ---------------------------------------------------------------------------
# Deterministic parameter init (torch Linear-style uniform bounds)
# ---------------------------------------------------------------------------
def init_linear(key, fan_in, fan_out, bias):
    kw, kb = jax.random.split(key)
    bound = 1.0 / math.sqrt(fan_in)
    w = jax.random.uniform(kw, (fan_in, fan_out), jnp.float32, -bound, bound)
    b = (jax.random.uniform(kb, (1, fan_out), jnp.float32, -bound, bound)
         if bias else None)
    return w, b


def init_gt_layer_params(key, Dm):
    ks = jax.random.split(key, 6)
    wq, _ = init_linear(ks[0], Dm, Dm, bias=False)
    wk, _ = init_linear(ks[1], Dm, Dm, bias=False)
    wv, _ = init_linear(ks[2], Dm, Dm, bias=False)
    wo, _ = init_linear(ks[3], Dm, Dm, bias=False)
    w1, b1 = init_linear(ks[4], Dm, Dm, bias=True)
    w2, b2 = init_linear(ks[5], Dm, Dm, bias=True)
    ones = jnp.ones((1, Dm), jnp.float32)
    zeros = jnp.zeros((1, Dm), jnp.float32)
    return dict(wq=wq, wk=wk, wv=wv, wo=wo, w1=w1, b1=b1, w2=w2, b2=b2,
                g1=ones, be1=zeros, g2=ones, be2=zeros)


# ---------------------------------------------------------------------------
# GT forward (token construction glue + fused Pallas transformer stack + predictor)
# ---------------------------------------------------------------------------
def gt_forward(node_feats, seqs, path_seqs, coarsen_mat,
               token_ids, layer_params, predictor_w,
               *, D, id_dim, nheads, temperature, norm=False):
    # TODO(synk): myGAT hgnn backbone is not provided in the reference; `node_feats`
    # stands in for its output (shape [num_nodes, D]).
    B = seqs.shape[0]
    h_all = jnp.concatenate([node_feats, jnp.zeros((1, D), jnp.float32)], axis=0)
    h_coarse = h_all[:node_feats.shape[0]]   # synthetic dataset -> no row masking

    # node tokens
    h_node = h_all[seqs]                                             # (B, Ln, D)
    h_node = jnp.concatenate(
        [h_node, jnp.broadcast_to(token_ids["node"], (B, h_node.shape[1], id_dim))], axis=2)
    # path tokens (mean over hops)
    h_ins = jnp.mean(h_all[path_seqs], axis=2)                       # (B, Lp, D)
    h_ins = jnp.concatenate(
        [h_ins, jnp.broadcast_to(token_ids["path"], (B, h_ins.shape[1], id_dim))], axis=2)
    # global tokens
    g_seq = jnp.matmul(coarsen_mat, h_coarse)                        # (C, D)
    g_seq = jnp.broadcast_to(g_seq[None], (B,) + g_seq.shape)
    g_seq = jnp.concatenate(
        [g_seq, jnp.broadcast_to(token_ids["global"], (B, g_seq.shape[1], id_dim))], axis=2)

    h = jnp.concatenate([h_node, h_ins, g_seq], axis=1)              # (B, S, Dm)
    _, S, Dm = h.shape
    Dp = _round_up(Dm, 128)                                          # lane-dense model dim

    h_pad = jnp.pad(h, ((0, 0), (0, 0), (0, Dp - Dm)))
    wmats, wvecs = stack_layer_params(layer_params, Dm, Dp, nheads, temperature)

    h_out = gt_layers_forward(h_pad, wmats, wvecs, nheads=nheads,
                              head_dim=Dm // nheads, dm_real=Dm)
    h_final = h_out[:, :, :Dm]

    out = h_final[:, 0, :] @ predictor_w                             # (B, num_class)
    if norm:
        out = out / (jnp.linalg.norm(out, axis=1, keepdims=True) + 1e-12)
    return out, h_final


if __name__ == "__main__":
    # small, shape-consistent synthetic config
    D, id_dim = 32, 32                  # embeddings_dimension, id_dim
    Dm = D + id_dim                     # GTLayer model dim = 64 (padded to 128 internally)
    nheads, num_layers, temperature = 2, 3, 1.0
    num_class = 3
    B, Ln, Lp, P, C = 8, 4, 2, 3, 2     # batch, node toks, path toks, path len, coarse toks
    N_nodes = 12

    key = jax.random.PRNGKey(0)
    keys = iter(jax.random.split(key, 32))

    node_feats = jax.random.normal(next(keys), (N_nodes, D), jnp.float32) * 0.5
    seqs = jax.random.randint(next(keys), (B, Ln), 0, N_nodes + 1)
    path_seqs = jax.random.randint(next(keys), (B, Lp, P), 0, N_nodes + 1)
    coarsen_mat = jax.random.uniform(next(keys), (C, N_nodes), jnp.float32)

    token_ids = {
        "node": jax.random.normal(next(keys), (1, id_dim), jnp.float32) * 0.1,
        "path": jax.random.normal(next(keys), (1, id_dim), jnp.float32) * 0.1,
        "global": jax.random.normal(next(keys), (1, id_dim), jnp.float32) * 0.1,
    }
    layer_params = [init_gt_layer_params(next(keys), Dm) for _ in range(num_layers)]
    predictor_w, _ = init_linear(next(keys), Dm, num_class, bias=False)

    out, h_final = gt_forward(node_feats, seqs, path_seqs, coarsen_mat,
                              token_ids, layer_params, predictor_w,
                              D=D, id_dim=id_dim, nheads=nheads,
                              temperature=temperature, norm=False)
    out = jax.block_until_ready(out)

    # cross-check the fused Pallas transformer stack against a pure-JAX f32 reference
    h_all = jnp.concatenate([node_feats, jnp.zeros((1, D), jnp.float32)], axis=0)
    h_node = jnp.concatenate(
        [h_all[seqs], jnp.broadcast_to(token_ids["node"], (B, Ln, id_dim))], axis=2)
    h_ins = jnp.concatenate(
        [jnp.mean(h_all[path_seqs], axis=2),
         jnp.broadcast_to(token_ids["path"], (B, Lp, id_dim))], axis=2)
    g_seq = jnp.broadcast_to((coarsen_mat @ h_all[:N_nodes])[None], (B, C, D))
    g_seq = jnp.concatenate(
        [g_seq, jnp.broadcast_to(token_ids["global"], (B, C, id_dim))], axis=2)
    h_ref = jnp.concatenate([h_node, h_ins, g_seq], axis=1)
    for p in layer_params:
        h_ref = gt_layer_ref(h_ref, p, nheads=nheads, temperature=temperature)
    out_ref = h_ref[:, 0, :] @ predictor_w

    # Tolerance accounts for bf16 matmul operands (f32 accumulation) in the kernel;
    # softmax normalization and LayerNorm statistics are exact f32.
    max_diff = jnp.max(jnp.abs(out - out_ref))
    assert jnp.allclose(out, out_ref, atol=5e-2, rtol=5e-2), f"mismatch: {max_diff}"
    assert out.shape == (B, num_class)
    print("KERNEL_OK")
</pallas_src>

<mosaic_0001>
module attributes {stable_mosaic.version = 11 : i64} {
  func.func @gt_stack_kernel(%arg0: i32, %arg1: i32, %arg2: memref<4x8x128xf32, #tpu.memory_space<vmem>>, %arg3: memref<3x6x128x128xbf16, #tpu.memory_space<vmem>>, %arg4: memref<3x8x128xf32, #tpu.memory_space<vmem>>, %arg5: memref<4x8x128xf32, #tpu.memory_space<vmem>>) attributes {dimension_semantics = [#tpu.dimension_semantics<parallel>, #tpu.dimension_semantics<arbitrary>], iteration_bounds = array<i64: 2, 3>, scalar_prefetch = 0 : i64, scratch_operands = 0 : i64, tpu.core_type = #tpu.core_type<tc>, window_params = [{transform_indices = @transform_0, window_bounds = array<i64: 4, 8, 128>}, {pipeline_mode = #tpu.pipeline_mode<synchronous>, transform_indices = @transform_1, window_bounds = array<i64: 3, 6, 128, 128>}, {pipeline_mode = #tpu.pipeline_mode<synchronous>, transform_indices = @transform_2, window_bounds = array<i64: 3, 8, 128>}, {transform_indices = @transform_3, window_bounds = array<i64: 4, 8, 128>}]} {
    %c0_i32 = arith.constant 0 : i32
    %0 = arith.cmpi eq, %arg1, %c0_i32 : i32
    %1 = arith.extui %0 : i1 to i32
    %c0_i32_0 = arith.constant 0 : i32
    %2 = arith.cmpi ne, %1, %c0_i32_0 : i32
    scf.if %2 {
      %c0_48 = arith.constant 0 : index
      %c0_49 = arith.constant 0 : index
      %c0_50 = arith.constant 0 : index
      %155 = vector.load %arg2[%c0_48, %c0_49, %c0_50] : memref<4x8x128xf32, #tpu.memory_space<vmem>>, vector<4x8x128xf32>
      %c0_51 = arith.constant 0 : index
      %c0_52 = arith.constant 0 : index
      %c0_53 = arith.constant 0 : index
      %156 = vector.load %arg5[%c0_51, %c0_52, %c0_53] : memref<4x8x128xf32, #tpu.memory_space<vmem>>, vector<4x8x128xf32>
      tpu.vector_store %arg5[%c0_51, %c0_52, %c0_53], %155 {strides = array<i32>} : memref<4x8x128xf32, #tpu.memory_space<vmem>>, vector<4x8x128xf32>,
    } else {
    }
    %3 = arith.index_cast %arg1 : i32 to index
    %c0 = arith.constant 0 : index
    %c0_1 = arith.constant 0 : index
    %c0_2 = arith.constant 0 : index
    %4 = vector.load %arg3[%3, %c0, %c0_1, %c0_2] : memref<3x6x128x128xbf16, #tpu.memory_space<vmem>>, vector<1x1x128x128xbf16>
    %5 = vector.shape_cast %4 : vector<1x1x128x128xbf16> to vector<128x128xbf16>
    %6 = arith.index_cast %arg1 : i32 to index
    %c1 = arith.constant 1 : index
    %c0_3 = arith.constant 0 : index
    %c0_4 = arith.constant 0 : index
    %7 = vector.load %arg3[%6, %c1, %c0_3, %c0_4] : memref<3x6x128x128xbf16, #tpu.memory_space<vmem>>, vector<1x1x128x128xbf16>
    %8 = vector.shape_cast %7 : vector<1x1x128x128xbf16> to vector<128x128xbf16>
    %9 = arith.index_cast %arg1 : i32 to index
    %c2 = arith.constant 2 : index
    %c0_5 = arith.constant 0 : index
    %c0_6 = arith.constant 0 : index
    %10 = vector.load %arg3[%9, %c2, %c0_5, %c0_6] : memref<3x6x128x128xbf16, #tpu.memory_space<vmem>>, vector<1x1x128x128xbf16>
    %11 = vector.shape_cast %10 : vector<1x1x128x128xbf16> to vector<128x128xbf16>
    %12 = arith.index_cast %arg1 : i32 to index
    %c3 = arith.constant 3 : index
    %c0_7 = arith.constant 0 : index
    %c0_8 = arith.constant 0 : index
    %13 = vector.load %arg3[%12, %c3, %c0_7, %c0_8] : memref<3x6x128x128xbf16, #tpu.memory_space<vmem>>, vector<1x1x128x128xbf16>
    %14 = vector.shape_cast %13 : vector<1x1x128x128xbf16> to vector<128x128xbf16>
    %15 = arith.index_cast %arg1 : i32 to index
    %c4 = arith.constant 4 : index
    %c0_9 = arith.constant 0 : index
    %c0_10 = arith.constant 0 : index
    %16 = vector.load %arg3[%15, %c4, %c0_9, %c0_10] : memref<3x6x128x128xbf16, #tpu.memory_space<vmem>>, vector<1x1x128x128xbf16>
    %17 = vector.shape_cast %16 : vector<1x1x128x128xbf16> to vector<128x128xbf16>
    %18 = arith.index_cast %arg1 : i32 to index
    %c5 = arith.constant 5 : index
    %c0_11 = arith.constant 0 : index
    %c0_12 = arith.constant 0 : index
    %19 = vector.load %arg3[%18, %c5, %c0_11, %c0_12] : memref<3x6x128x128xbf16, #tpu.memory_space<vmem>>, vector<1x1x128x128xbf16>
    %20 = vector.shape_cast %19 : vector<1x1x128x128xbf16> to vector<128x128xbf16>
    %21 = arith.index_cast %arg1 : i32 to index
    %c0_13 = arith.constant 0 : index
    %c0_14 = arith.constant 0 : index
    %22 = vector.load %arg4[%21, %c0_13, %c0_14] : memref<3x8x128xf32, #tpu.memory_space<vmem>>, vector<1x8x128xf32>
    %23 = vector.shape_cast %22 : vector<1x8x128xf32> to vector<8x128xf32>
    %24 = vector.extract_strided_slice %23 {offsets = [0, 0], sizes = [1, 128], strides = [1, 1]} : vector<8x128xf32> to vector<1x128xf32>
    %25 = vector.extract_strided_slice %23 {offsets = [1, 0], sizes = [1, 128], strides = [1, 1]} : vector<8x128xf32> to vector<1x128xf32>
    %26 = vector.extract_strided_slice %23 {offsets = [2, 0], sizes = [1, 128], strides = [1, 1]} : vector<8x128xf32> to vector<1x128xf32>
    %27 = vector.extract_strided_slice %23 {offsets = [3, 0], sizes = [1, 128], strides = [1, 1]} : vector<8x128xf32> to vector<1x128xf32>
    %28 = vector.extract_strided_slice %23 {offsets = [4, 0], sizes = [1, 128], strides = [1, 1]} : vector<8x128xf32> to vector<1x128xf32>
    %29 = vector.extract_strided_slice %23 {offsets = [5, 0], sizes = [1, 128], strides = [1, 1]} : vector<8x128xf32> to vector<1x128xf32>
    %30 = tpu.iota {dimensions = array<i32: 1>} : vector<1x128xi32>
    %c64_i32 = arith.constant 64 : i32
    %31 = vector.broadcast %c64_i32 : i32 to vector<1x128xi32>
    %32 = arith.cmpi slt, %30, %31 : vector<1x128xi32>
    %33 = arith.extui %32 : vector<1x128xi1> to vector<1x128xi32>
    %34 = arith.sitofp %33 : vector<1x128xi32> to vector<1x128xf32>
    %c0_15 = arith.constant 0 : index
    %c0_16 = arith.constant 0 : index
    %c0_17 = arith.constant 0 : index
    %35 = vector.load %arg5[%c0_15, %c0_16, %c0_17] : memref<4x8x128xf32, #tpu.memory_space<vmem>>, vector<4x8x128xf32>
    %36 = vector.shape_cast %35 : vector<4x8x128xf32> to vector<32x128xf32>
    %37 = arith.truncf %36 : vector<32x128xf32> to vector<32x128xbf16>
    %cst = arith.constant dense<0.000000e+00> : vector<32x128xf32>
    %38 = tpu.matmul %37, %5, %cst {dimension_numbers = #tpu.dot_dimension_numbers<[1], [0], [0], [1], [0, 0, 1, 1], [], []>} : vector<32x128xbf16>, vector<128x128xbf16>, vector<32x128xf32> -> vector<32x128xf32>
    %39 = vector.shape_cast %38 : vector<32x128xf32> to vector<4x8x128xf32>
    %cst_18 = arith.constant dense<0.000000e+00> : vector<32x128xf32>
    %40 = tpu.matmul %37, %8, %cst_18 {dimension_numbers = #tpu.dot_dimension_numbers<[1], [0], [0], [1], [0, 0, 1, 1], [], []>} : vector<32x128xbf16>, vector<128x128xbf16>, vector<32x128xf32> -> vector<32x128xf32>
    %41 = vector.shape_cast %40 : vector<32x128xf32> to vector<4x8x128xf32>
    %cst_19 = arith.constant dense<0.000000e+00> : vector<32x128xf32>
    %42 = tpu.matmul %37, %11, %cst_19 {dimension_numbers = #tpu.dot_dimension_numbers<[1], [0], [0], [1], [0, 0, 1, 1], [], []>} : vector<32x128xbf16>, vector<128x128xbf16>, vector<32x128xf32> -> vector<32x128xf32>
    %43 = vector.shape_cast %42 : vector<32x128xf32> to vector<4x8x128xf32>
    %44 = vector.extract_strided_slice %39 {offsets = [0, 0, 0], sizes = [4, 8, 32], strides = [1, 1, 1]} : vector<4x8x128xf32> to vector<4x8x32xf32>
    %45 = arith.truncf %44 : vector<4x8x32xf32> to vector<4x8x32xbf16>
    %46 = vector.extract_strided_slice %41 {offsets = [0, 0, 0], sizes = [4, 8, 32], strides = [1, 1, 1]} : vector<4x8x128xf32> to vector<4x8x32xf32>
    %47 = arith.truncf %46 : vector<4x8x32xf32> to vector<4x8x32xbf16>
    %48 = vector.extract_strided_slice %43 {offsets = [0, 0, 0], sizes = [4, 8, 32], strides = [1, 1, 1]} : vector<4x8x128xf32> to vector<4x8x32xf32>
    %49 = arith.truncf %48 : vector<4x8x32xf32> to vector<4x8x32xbf16>
    "tpu.trace_start"() <{level = 10 : i32, message = "bqd,bkd->bqk"}> : () -> ()
    %cst_20 = arith.constant dense<0.000000e+00> : vector<4x8x8xf32>
    %50 = tpu.matmul %45, %47, %cst_20 {dimension_numbers = #tpu.dot_dimension_numbers<[2], [2], [1], [1], [0, 0, 0, 1, 1, 1], [0], [0]>} : vector<4x8x32xbf16>, vector<4x8x32xbf16>, vector<4x8x8xf32> -> vector<4x8x8xf32>
    "tpu.trace_stop"() : () -> ()
    %cst_21 = arith.constant dense<0xFF800000> : vector<4x8xf32>
    %51 = vector.multi_reduction <maximumf>, %50, %cst_21 [2] : vector<4x8x8xf32> to vector<4x8xf32>
    %52 = vector.shape_cast %51 : vector<4x8xf32> to vector<4x8x1xf32>
    %53 = vector.broadcast %52 : vector<4x8x1xf32> to vector<4x8x8xf32>
    %54 = arith.subf %50, %53 : vector<4x8x8xf32>
    %55 = math.exp %54 : vector<4x8x8xf32>
    %cst_22 = arith.constant dense<0.000000e+00> : vector<4x8xf32>
    %56 = vector.multi_reduction <add>, %55, %cst_22 [2] : vector<4x8x8xf32> to vector<4x8xf32>
    %57 = vector.shape_cast %56 : vector<4x8xf32> to vector<4x8x1xf32>
    %58 = vector.broadcast %57 : vector<4x8x1xf32> to vector<4x8x8xf32>
    %59 = arith.divf %55, %58 : vector<4x8x8xf32>
    %60 = arith.truncf %59 : vector<4x8x8xf32> to vector<4x8x8xbf16>
    "tpu.trace_start"() <{level = 10 : i32, message = "bqk,bkd->bqd"}> : () -> ()
    %cst_23 = arith.constant dense<0.000000e+00> : vector<4x8x32xf32>
    %61 = tpu.matmul %60, %49, %cst_23 {dimension_numbers = #tpu.dot_dimension_numbers<[2], [1], [1], [2], [0, 0, 0, 1, 1, 2], [0], [0]>} : vector<4x8x8xbf16>, vector<4x8x32xbf16>, vector<4x8x32xf32> -> vector<4x8x32xf32>
    "tpu.trace_stop"() : () -> ()
    %62 = vector.extract_strided_slice %39 {offsets = [0, 0, 32], sizes = [4, 8, 32], strides = [1, 1, 1]} : vector<4x8x128xf32> to vector<4x8x32xf32>
    %63 = arith.truncf %62 : vector<4x8x32xf32> to vector<4x8x32xbf16>
    %64 = vector.extract_strided_slice %41 {offsets = [0, 0, 32], sizes = [4, 8, 32], strides = [1, 1, 1]} : vector<4x8x128xf32> to vector<4x8x32xf32>
    %65 = arith.truncf %64 : vector<4x8x32xf32> to vector<4x8x32xbf16>
    %66 = vector.extract_strided_slice %43 {offsets = [0, 0, 32], sizes = [4, 8, 32], strides = [1, 1, 1]} : vector<4x8x128xf32> to vector<4x8x32xf32>
    %67 = arith.truncf %66 : vector<4x8x32xf32> to vector<4x8x32xbf16>
    "tpu.trace_start"() <{level = 10 : i32, message = "bqd,bkd->bqk"}> : () -> ()
    %cst_24 = arith.constant dense<0.000000e+00> : vector<4x8x8xf32>
    %68 = tpu.matmul %63, %65, %cst_24 {dimension_numbers = #tpu.dot_dimension_numbers<[2], [2], [1], [1], [0, 0, 0, 1, 1, 1], [0], [0]>} : vector<4x8x32xbf16>, vector<4x8x32xbf16>, vector<4x8x8xf32> -> vector<4x8x8xf32>
    "tpu.trace_stop"() : () -> ()
    %cst_25 = arith.constant dense<0xFF800000> : vector<4x8xf32>
    %69 = vector.multi_reduction <maximumf>, %68, %cst_25 [2] : vector<4x8x8xf32> to vector<4x8xf32>
    %70 = vector.shape_cast %69 : vector<4x8xf32> to vector<4x8x1xf32>
    %71 = vector.broadcast %70 : vector<4x8x1xf32> to vector<4x8x8xf32>
    %72 = arith.subf %68, %71 : vector<4x8x8xf32>
    %73 = math.exp %72 : vector<4x8x8xf32>
    %cst_26 = arith.constant dense<0.000000e+00> : vector<4x8xf32>
    %74 = vector.multi_reduction <add>, %73, %cst_26 [2] : vector<4x8x8xf32> to vector<4x8xf32>
    %75 = vector.shape_cast %74 : vector<4x8xf32> to vector<4x8x1xf32>
    %76 = vector.broadcast %75 : vector<4x8x1xf32> to vector<4x8x8xf32>
    %77 = arith.divf %73, %76 : vector<4x8x8xf32>
    %78 = arith.truncf %77 : vector<4x8x8xf32> to vector<4x8x8xbf16>
    "tpu.trace_start"() <{level = 10 : i32, message = "bqk,bkd->bqd"}> : () -> ()
    %cst_27 = arith.constant dense<0.000000e+00> : vector<4x8x32xf32>
    %79 = tpu.matmul %78, %67, %cst_27 {dimension_numbers = #tpu.dot_dimension_numbers<[2], [1], [1], [2], [0, 0, 0, 1, 1, 2], [0], [0]>} : vector<4x8x8xbf16>, vector<4x8x32xbf16>, vector<4x8x32xf32> -> vector<4x8x32xf32>
    "tpu.trace_stop"() : () -> ()
    %80 = tpu.concatenate %61, %79 in 2 : vector<4x8x32xf32>, vector<4x8x32xf32> -> vector<4x8x64xf32>
    %81 = vector.shape_cast %80 : vector<4x8x64xf32> to vector<32x64xf32>
    %82 = vector.extract_strided_slice %14 {offsets = [0, 0], sizes = [64, 128], strides = [1, 1]} : vector<128x128xbf16> to vector<64x128xbf16>
    %83 = arith.truncf %81 : vector<32x64xf32> to vector<32x64xbf16>
    %cst_28 = arith.constant dense<0.000000e+00> : vector<32x128xf32>
    %84 = tpu.matmul %83, %82, %cst_28 {dimension_numbers = #tpu.dot_dimension_numbers<[1], [0], [0], [1], [0, 0, 1, 1], [], []>} : vector<32x64xbf16>, vector<64x128xbf16>, vector<32x128xf32> -> vector<32x128xf32>
    %cst_29 = arith.constant 0.000000e+00 : f32
    %85 = vector.broadcast %cst_29 : f32 to vector<32x128xf32>
    %86 = arith.cmpf oge, %84, %85 : vector<32x128xf32>
    %cst_30 = arith.constant 2.000000e-01 : f32
    %87 = vector.broadcast %cst_30 : f32 to vector<32x128xf32>
    %88 = arith.mulf %87, %84 : vector<32x128xf32>
    %89 = arith.select %86, %84, %88 : vector<32x128xi1>, vector<32x128xf32>
    %90 = arith.addf %89, %36 : vector<32x128xf32>
    %91 = vector.broadcast %34 : vector<1x128xf32> to vector<32x128xf32>
    %92 = arith.mulf %90, %91 : vector<32x128xf32>
    %cst_31 = arith.constant dense<0.000000e+00> : vector<32xf32>
    %93 = vector.multi_reduction <add>, %92, %cst_31 [1] : vector<32x128xf32> to vector<32xf32>
    %94 = vector.shape_cast %93 : vector<32xf32> to vector<32x1xf32>
    %cst_32 = arith.constant 1.562500e-02 : f32
    %95 = vector.broadcast %cst_32 : f32 to vector<32x1xf32>
    %96 = arith.mulf %94, %95 : vector<32x1xf32>
    %97 = vector.broadcast %96 : vector<32x1xf32> to vector<32x128xf32>
    %98 = arith.subf %92, %97 : vector<32x128xf32>
    %99 = vector.broadcast %34 : vector<1x128xf32> to vector<32x128xf32>
    %100 = arith.mulf %98, %99 : vector<32x128xf32>
    %101 = arith.mulf %100, %100 : vector<32x128xf32>
    %cst_33 = arith.constant dense<0.000000e+00> : vector<32xf32>
    %102 = vector.multi_reduction <add>, %101, %cst_33 [1] : vector<32x128xf32> to vector<32xf32>
    %103 = vector.shape_cast %102 : vector<32xf32> to vector<32x1xf32>
    %cst_34 = arith.constant 1.562500e-02 : f32
    %104 = vector.broadcast %cst_34 : f32 to vector<32x1xf32>
    %105 = arith.mulf %103, %104 : vector<32x1xf32>
    %cst_35 = arith.constant 9.99999974E-6 : f32
    %106 = vector.broadcast %cst_35 : f32 to vector<32x1xf32>
    %107 = arith.addf %105, %106 : vector<32x1xf32>
    %108 = math.rsqrt %107 : vector<32x1xf32>
    %109 = vector.broadcast %108 : vector<32x1xf32> to vector<32x128xf32>
    %110 = arith.mulf %100, %109 : vector<32x128xf32>
    %111 = vector.broadcast %26 : vector<1x128xf32> to vector<32x128xf32>
    %112 = arith.mulf %110, %111 : vector<32x128xf32>
    %113 = vector.broadcast %27 : vector<1x128xf32> to vector<32x128xf32>
    %114 = arith.addf %112, %113 : vector<32x128xf32>
    %115 = arith.truncf %114 : vector<32x128xf32> to vector<32x128xbf16>
    %cst_36 = arith.constant dense<0.000000e+00> : vector<32x128xf32>
    %116 = tpu.matmul %115, %17, %cst_36 {dimension_numbers = #tpu.dot_dimension_numbers<[1], [0], [0], [1], [0, 0, 1, 1], [], []>} : vector<32x128xbf16>, vector<128x128xbf16>, vector<32x128xf32> -> vector<32x128xf32>
    %117 = vector.broadcast %24 : vector<1x128xf32> to vector<32x128xf32>
    %118 = arith.addf %116, %117 : vector<32x128xf32>
    %cst_37 = arith.constant 0.000000e+00 : f32
    %119 = vector.broadcast %cst_37 : f32 to vector<32x128xf32>
    %120 = arith.cmpf oge, %118, %119 : vector<32x128xf32>
    %cst_38 = arith.constant 2.000000e-01 : f32
    %121 = vector.broadcast %cst_38 : f32 to vector<32x128xf32>
    %122 = arith.mulf %121, %118 : vector<32x128xf32>
    %123 = arith.select %120, %118, %122 : vector<32x128xi1>, vector<32x128xf32>
    %124 = arith.truncf %123 : vector<32x128xf32> to vector<32x128xbf16>
    %cst_39 = arith.constant dense<0.000000e+00> : vector<32x128xf32>
    %125 = tpu.matmul %124, %20, %cst_39 {dimension_numbers = #tpu.dot_dimension_numbers<[1], [0], [0], [1], [0, 0, 1, 1], [], []>} : vector<32x128xbf16>, vector<128x128xbf16>, vector<32x128xf32> -> vector<32x128xf32>
    %126 = vector.broadcast %25 : vector<1x128xf32> to vector<32x128xf32>
    %127 = arith.addf %125, %126 : vector<32x128xf32>
    %128 = arith.addf %114, %127 : vector<32x128xf32>
    %129 = vector.broadcast %34 : vector<1x128xf32> to vector<32x128xf32>
    %130 = arith.mulf %128, %129 : vector<32x128xf32>
    %cst_40 = arith.constant dense<0.000000e+00> : vector<32xf32>
    %131 = vector.multi_reduction <add>, %130, %cst_40 [1] : vector<32x128xf32> to vector<32xf32>
    %132 = vector.shape_cast %131 : vector<32xf32> to vector<32x1xf32>
    %cst_41 = arith.constant 1.562500e-02 : f32
    %133 = vector.broadcast %cst_41 : f32 to vector<32x1xf32>
    %134 = arith.mulf %132, %133 : vector<32x1xf32>
    %135 = vector.broadcast %134 : vector<32x1xf32> to vector<32x128xf32>
    %136 = arith.subf %130, %135 : vector<32x128xf32>
    %137 = vector.broadcast %34 : vector<1x128xf32> to vector<32x128xf32>
    %138 = arith.mulf %136, %137 : vector<32x128xf32>
    %139 = arith.mulf %138, %138 : vector<32x128xf32>
    %cst_42 = arith.constant dense<0.000000e+00> : vector<32xf32>
    %140 = vector.multi_reduction <add>, %139, %cst_42 [1] : vector<32x128xf32> to vector<32xf32>
    %141 = vector.shape_cast %140 : vector<32xf32> to vector<32x1xf32>
    %cst_43 = arith.constant 1.562500e-02 : f32
    %142 = vector.broadcast %cst_43 : f32 to vector<32x1xf32>
    %143 = arith.mulf %141, %142 : vector<32x1xf32>
    %cst_44 = arith.constant 9.99999974E-6 : f32
    %144 = vector.broadcast %cst_44 : f32 to vector<32x1xf32>
    %145 = arith.addf %143, %144 : vector<32x1xf32>
    %146 = math.rsqrt %145 : vector<32x1xf32>
    %147 = vector.broadcast %146 : vector<32x1xf32> to vector<32x128xf32>
    %148 = arith.mulf %138, %147 : vector<32x128xf32>
    %149 = vector.broadcast %28 : vector<1x128xf32> to vector<32x128xf32>
    %150 = arith.mulf %148, %149 : vector<32x128xf32>
    %151 = vector.broadcast %29 : vector<1x128xf32> to vector<32x128xf32>
    %152 = arith.addf %150, %151 : vector<32x128xf32>
    %153 = vector.shape_cast %152 : vector<32x128xf32> to vector<4x8x128xf32>
    %c0_45 = arith.constant 0 : index
    %c0_46 = arith.constant 0 : index
    %c0_47 = arith.constant 0 : index
    %154 = vector.load %arg5[%c0_45, %c0_46, %c0_47] : memref<4x8x128xf32, #tpu.memory_space<vmem>>, vector<4x8x128xf32>
    tpu.vector_store %arg5[%c0_45, %c0_46, %c0_47], %153 {strides = array<i32>} : memref<4x8x128xf32, #tpu.memory_space<vmem>>, vector<4x8x128xf32>,
    return
  }
  func.func @transform_0(%arg0: i32, %arg1: i32) -> (i32, i32, i32) {
    %c0_i32 = arith.constant 0 : i32
    %c0_i32_0 = arith.constant 0 : i32
    %c0_i32_1 = arith.constant 0 : i32
    return %arg0, %c0_i32, %c0_i32_0 : i32, i32, i32
  }
  func.func @transform_1(%arg0: i32, %arg1: i32) -> (i32, i32, i32, i32) {
    %c0_i32 = arith.constant 0 : i32
    %c0_i32_0 = arith.constant 0 : i32
    %c0_i32_1 = arith.constant 0 : i32
    %c0_i32_2 = arith.constant 0 : i32
    %c0_i32_3 = arith.constant 0 : i32
    return %c0_i32, %c0_i32_0, %c0_i32_1, %c0_i32_2 : i32, i32, i32, i32
  }
  func.func @transform_2(%arg0: i32, %arg1: i32) -> (i32, i32, i32) {
    %c0_i32 = arith.constant 0 : i32
    %c0_i32_0 = arith.constant 0 : i32
    %c0_i32_1 = arith.constant 0 : i32
    %c0_i32_2 = arith.constant 0 : i32
    return %c0_i32, %c0_i32_0, %c0_i32_1 : i32, i32, i32
  }
  func.func @transform_3(%arg0: i32, %arg1: i32) -> (i32, i32, i32) {
    %c0_i32 = arith.constant 0 : i32
    %c0_i32_0 = arith.constant 0 : i32
    %c0_i32_1 = arith.constant 0 : i32
    return %arg0, %c0_i32, %c0_i32_0 : i32, i32, i32
  }
}

</mosaic_0001>

<llo_original>
// kernel: tpu_custom_call.1
$region0: #{tpu_custom_call.1}
  #allocation0 [shape = 'u32[]', space=smem, size = 0x4, offset = 0x4, fixed_abs, tag = 'smem constant byte address 0x4 - core index']
  #allocation1 [shape = 'u32[144,128]{1,0:T(1,128)}', space=vmem, size = 0x12000, scoped, tag = 'internal scratch']
  %s0 = inlined_call_operand.hbm [shape: f32[8,8,128], index: 0, kind: input, shape index: {}]
  %s1 = inlined_call_operand.hbm [shape: bf16[3,6,128,128], index: 1, kind: input, shape index: {}]
  %s2 = inlined_call_operand.hbm [shape: f32[3,8,128], index: 2, kind: input, shape index: {}]
  %s3 = inlined_call_operand.hbm [shape: f32[8,8,128], index: 3, kind: output, shape index: {}]
  %s4 = sld [smem:[#allocation0]]
  $region61: #{tpu_custom_call.1} parent=0
    _
  %s6 = ssub.s32 1, %s4
  %s7 = scalar_select 0, %s6, %s4
  $region1: #{tpu_custom_call.1} parent=0
    #allocation2 [shape = 'u8[32768]{0}', space=vmem, size = 0x8000, scoped, tag = 'input window, operand 0']
    #allocation3 [shape = 's32[2]{0}', space=sflag, size = 0x8, scoped, tag = 'scoped memory for tpu_custom_call.1']
    #allocation4 [shape = 's32[2]{0}', space=sflag, size = 0x8, scoped, tag = 'scoped memory for tpu_custom_call.1']
    #allocation5 [shape = 'u8[589824]{0}', space=vmem, size = 0x90000, scoped, tag = 'input window, operand 1, single buffered']
    #allocation6 [shape = 's32[1]{0}', space=sflag, size = 0x4, scoped, tag = 'scoped memory for tpu_custom_call.1']
    #allocation7 [shape = 'u8[12288]{0}', space=vmem, size = 0x3000, scoped, tag = 'input window, operand 2, single buffered']
    #allocation8 [shape = 'u8[32768]{0}', space=vmem, size = 0x8000, scoped, tag = 'output window, operand 0']
    %8 = vsyncpa [#allocation3], 0
    %s9 = scalar_lea.sflag [#allocation3], 1
    %10 = vsyncpa %s9, 0
    %11 = vsyncpa [#allocation6], 0
    %12 = vsyncpa [#allocation4], 0
    %s13 = scalar_lea.sflag [#allocation4], 1
    %14 = vsyncpa %s13, 0
    loop: start=0, step=1, limit=8
    $region2: #{tpu_custom_call.1} parent=1 // loop_pre_header
      _
    $region3: #{tpu_custom_call.1} parent=1 // loop_header
      %s16 = sphi 0, %s20
      %p17 = scmp.ge.s32.totalorder %s16, 8
      %s23 = sphi 0, %s35
      %s24 = sphi 0, %s31
      %s25 = sphi 0, %s23
      %s26 = sphi 0, %s24
      %s27 = sphi 0, %s25
      %s28 = sphi 0, %s26
      %s38 = sphi 0, %s40
      %s41 = sphi 0, %s38
      %s42 = sphi 0, %s41
      %s58 = sphi 0, %s42
      %s62 = sphi 0, %s62
      %s64 = sphi 0, %s62
      %s65 = sphi 0, %s64
      %s79 = sphi 0, %s65
      %s83 = sphi 0, %s83
      %s85 = sphi 0, %s83
      %s86 = sphi 0, %s85
      %s100 = sphi 0, %s86
      %s106 = sphi 0, %s108
      %s109 = sphi 0, %s106
      %s110 = sphi 0, %s109
      %s126 = sphi 0, %s110
    $region4: #{tpu_custom_call.1} parent=1 // loop_header_branch
      %19 = sbr.rel (%p17) target = $region8
    $region5: #{tpu_custom_call.1} parent=1 // loop_body
      %s21 = ssub.s32 %s16, 1
      %s22 = ssub.s32 %s16, 2
      %s29 = sadd.s32 1, %s24
      %p30 = scmp.ge.s32.totalorder %s29, 3
      %s31 = scalar_select %p30, 0, %s29
      %s32 = sadd.s32 1, %s23
      %s33 = scalar_select %p30, %s32, %s23
      %p34 = scmp.ge.s32.totalorder %s33, 2
      %s35 = scalar_select %p34, 0, %s33
      %s36 = ssub.s32 %s23, %s35
      %p37 = scmp.eq.s32.totalorder %s36, 0
      %s39 = sadd.s32 %s38, 1
      %s40 = scalar_select %p37, %s38, %s39
      %p43 = pneg %p37
      %p44 = scmp.eq.s32.totalorder %s16, 5
      %p45 = por %p43, %p44
      %p46 = scmp.ne.s32.totalorder %s38, %s41
      %p47 = scmp.eq.s32.totalorder %s16, 0
      %p48 = por %p46, %p47
      %p49 = scmp.ne.s32.totalorder %s38, %s41
      %p50 = scmp.eq.s32.totalorder %s21, 5
      %p51 = por %p49, %p50
      %p52 = scmp.ne.s32.totalorder %s41, %s42
      %p53 = scmp.eq.s32.totalorder %s21, 0
      %p54 = por %p52, %p53
      %p55 = scmp.ne.s32.totalorder %s41, %s42
      %p56 = scmp.eq.s32.totalorder %s22, 5
      %p57 = por %p55, %p56
      %p59 = scmp.ne.s32.totalorder %s42, %s58
      %p60 = scmp.eq.s32.totalorder %s22, 0
      %p61 = por %p59, %p60
      %s63 = sadd.s32 %s62, 1
      %p66 = scmp.eq.s32.totalorder %s16, 5
      %p67 = scmp.ne.s32.totalorder %s62, %s64
      %p68 = scmp.eq.s32.totalorder %s16, 0
      %p69 = por %p67, %p68
      %p70 = scmp.ne.s32.totalorder %s62, %s64
      %p71 = scmp.eq.s32.totalorder %s21, 5
      %p72 = por %p70, %p71
      %p73 = scmp.ne.s32.totalorder %s64, %s65
      %p74 = scmp.eq.s32.totalorder %s21, 0
      %p75 = por %p73, %p74
      %p76 = scmp.ne.s32.totalorder %s64, %s65
      %p77 = scmp.eq.s32.totalorder %s22, 5
      %p78 = por %p76, %p77
      %p80 = scmp.ne.s32.totalorder %s65, %s79
      %p81 = scmp.eq.s32.totalorder %s22, 0
      %p82 = por %p80, %p81
      %s84 = sadd.s32 %s83, 1
      %p87 = scmp.eq.s32.totalorder %s16, 5
      %p88 = scmp.ne.s32.totalorder %s83, %s85
      %p89 = scmp.eq.s32.totalorder %s16, 0
      %p90 = por %p88, %p89
      %p91 = scmp.ne.s32.totalorder %s83, %s85
      %p92 = scmp.eq.s32.totalorder %s21, 5
      %p93 = por %p91, %p92
      %p94 = scmp.ne.s32.totalorder %s85, %s86
      %p95 = scmp.eq.s32.totalorder %s21, 0
      %p96 = por %p94, %p95
      %p97 = scmp.ne.s32.totalorder %s85, %s86
      %p98 = scmp.eq.s32.totalorder %s22, 5
      %p99 = por %p97, %p98
      %p101 = scmp.ne.s32.totalorder %s86, %s100
      %p102 = scmp.eq.s32.totalorder %s22, 0
      %p103 = por %p101, %p102
      %s104 = ssub.s32 %s23, %s35
      %p105 = scmp.eq.s32.totalorder %s104, 0
      %s107 = sadd.s32 %s106, 1
      %s108 = scalar_select %p105, %s106, %s107
      %p111 = pneg %p105
      %p112 = scmp.eq.s32.totalorder %s16, 5
      %p113 = por %p111, %p112
      %p114 = scmp.ne.s32.totalorder %s106, %s109
      %p115 = scmp.eq.s32.totalorder %s16, 0
      %p116 = por %p114, %p115
      %p117 = scmp.ne.s32.totalorder %s106, %s109
      %p118 = scmp.eq.s32.totalorder %s21, 5
      %p119 = por %p117, %p118
      %p120 = scmp.ne.s32.totalorder %s109, %s110
      %p121 = scmp.eq.s32.totalorder %s21, 0
      %p122 = por %p120, %p121
      %p123 = scmp.ne.s32.totalorder %s109, %s110
      %p124 = scmp.eq.s32.totalorder %s22, 5
      %p125 = por %p123, %p124
      %p127 = scmp.ne.s32.totalorder %s110, %s126
      %p128 = scmp.eq.s32.totalorder %s22, 0
      %p129 = por %p127, %p128
      %p130 = scmp.le.s32.totalorder 1, %s16
      %p131 = scmp.lt.s32.totalorder %s16, 7
      %p132 = pnand %p130, %p131
      %p133 = pneg %p132
      // Predicated region
      $region9: #{tpu_custom_call.1} parent=5 // pred_check
        _
      $region10: #{tpu_custom_call.1} parent=5 // pred_check_branch
        %135 = sbr.rel (%p132) target = $region12
      $region11: #{tpu_custom_call.1} parent=5 // pred_region
        %s136 = ssub.s32 %s16, 1
        // Predicated region
        $region13: #{tpu_custom_call.1} parent=11 // pred_check
          %p137 = pneg %p75
        $region14: #{tpu_custom_call.1} parent=11 // pred_check_branch
          %139 = sbr.rel (%p137) target = $region16
        $region15: #{tpu_custom_call.1} parent=11 // pred_region
          %s141 = ssub.s32 18432, 18432
          %142 = vsyncadd [#allocation6], %s141
          %s143 = sshll.u32 [#allocation5], 4
          %s144 = int_to_ptr.vmem [resolvable:$true] %s143
          %149 = dma.hbm_to_vmem [thread:$0]  %s1, 18432, %s144, [#allocation6], 64, 64, 4
        $region16: #{tpu_custom_call.1} parent=11 // pred_fallthru
          _
        // Predicated region
        $region17: #{tpu_custom_call.1} parent=11 // pred_check
          %p150 = pneg %p96
        $region18: #{tpu_custom_call.1} parent=11 // pred_check_branch
          %152 = sbr.rel (%p150) target = $region20
        $region19: #{tpu_custom_call.1} parent=11 // pred_region
          %s154 = ssub.s32 384, 384
          %155 = vsyncadd [#allocation6], %s154
          %s156 = sshll.u32 [#allocation7], 4
          %s157 = int_to_ptr.vmem [resolvable:$true] %s156
          %162 = dma.hbm_to_vmem [thread:$0]  %s2, 384, %s157, [#allocation6], 128, 128, 8
        $region20: #{tpu_custom_call.1} parent=11 // pred_fallthru
          _
      $region12: #{tpu_custom_call.1} parent=5 // pred_fallthru
        _
      %p163 = scmp.lt.s32.totalorder %s16, 6
      // Predicated region
      $region21: #{tpu_custom_call.1} parent=5 // pred_check
        %p164 = pneg %p163
      $region22: #{tpu_custom_call.1} parent=5 // pred_check_branch
        %166 = sbr.rel (%p164) target = $region24
      $region23: #{tpu_custom_call.1} parent=5 // pred_region
        // Predicated region
        $region25: #{tpu_custom_call.1} parent=23 // pred_check
          %p167 = pneg %p48
        $region26: #{tpu_custom_call.1} parent=23 // pred_check_branch
          %169 = sbr.rel (%p167) target = $region28
        $region27: #{tpu_custom_call.1} parent=23 // pred_region
          %s170 = sand.u32 %s38, 1
          %s171 = scalar_lea.sflag [#allocation3], %s170
          %s172 = sand.u32 %s38, 1
          %s173 = smul.addr %s172, 32
          %s174 = scalar_lea.vmem [#allocation2], %s173
          %s175 = smul.u32 4, %s23
          %s177 = ssub.s32 512, 512
          %178 = vsyncadd %s171, %s177
          %s179 = smul.addr %s175, 128
          %s180 = scalar_lea.hbm %s0, %s179
          %s181 = sshll.u32 %s174, 4
          %s182 = int_to_ptr.vmem [resolvable:$true] %s181
          %187 = dma.hbm_to_vmem [thread:$0]  %s180, 512, %s182, %s171, 128, 128, 8
        $region28: #{tpu_custom_call.1} parent=23 // pred_fallthru
          _
      $region24: #{tpu_custom_call.1} parent=5 // pred_fallthru
        _
      %p188 = scmp.le.s32.totalorder 1, %s16
      %p189 = scmp.lt.s32.totalorder %s16, 7
      %p190 = pnand %p188, %p189
      %p191 = pneg %p190
      // Predicated region
      $region29: #{tpu_custom_call.1} parent=5 // pred_check
        _
      $region30: #{tpu_custom_call.1} parent=5 // pred_check_branch
        %193 = sbr.rel (%p190) target = $region32
      $region31: #{tpu_custom_call.1} parent=5 // pred_region
        %s194 = ssub.s32 %s16, 1
        %s195 = sand.u32 %s41, 1
        %s196 = scalar_lea.sflag [#allocation3], %s195
        %s197 = sand.u32 %s41, 1
        %s198 = smul.addr %s197, 32
        %s199 = scalar_lea.vmem [#allocation2], %s198
        // Predicated region
        $region33: #{tpu_custom_call.1} parent=31 // pred_check
          %p200 = pneg %p54
        $region34: #{tpu_custom_call.1} parent=31 // pred_check_branch
          %202 = sbr.rel (%p200) target = $region36
        $region35: #{tpu_custom_call.1} parent=31 // pred_region
          %203 = dma.done %s196, 512
        $region36: #{tpu_custom_call.1} parent=31 // pred_fallthru
          _
        // Predicated region
        $region37: #{tpu_custom_call.1} parent=31 // pred_check
          %p204 = pneg %p75
        $region38: #{tpu_custom_call.1} parent=31 // pred_check_branch
          %206 = sbr.rel (%p204) target = $region40
        $region39: #{tpu_custom_call.1} parent=31 // pred_region
          %207 = dma.done [#allocation6], 18432
        $region40: #{tpu_custom_call.1} parent=31 // pred_fallthru
          _
        // Predicated region
        $region41: #{tpu_custom_call.1} parent=31 // pred_check
          %p208 = pneg %p96
        $region42: #{tpu_custom_call.1} parent=31 // pred_check_branch
          %210 = sbr.rel (%p208) target = $region44
        $region43: #{tpu_custom_call.1} parent=31 // pred_region
          %211 = dma.done [#allocation6], 384
        $region44: #{tpu_custom_call.1} parent=31 // pred_fallthru
          _
        %s212 = sand.u32 %s41, 1
        %s213 = scalar_lea.sflag [#allocation3], %s212
        %s214 = sand.u32 %s41, 1
        %s215 = smul.addr %s214, 32
        %s216 = scalar_lea.vmem [#allocation2], %s215
        %p217 = pneg %p54
        %p218 = pneg %p51
        %p219 = pneg %p75
        %p220 = pneg %p72
        %p221 = pneg %p96
        %p222 = pneg %p93
        %p223 = pneg %p122
        %p224 = pneg %p119
        %s225 = sand.u32 %s109, 1
        %s226 = scalar_lea.sflag [#allocation4], %s225
        %s227 = sand.u32 %s109, 1
        %s228 = smul.addr %s227, 32
        %s229 = scalar_lea.vmem [#allocation8], %s228
        %s230 = smul.u32 4, %s25
        %s231 = smul.u32 4, %s25
        %p233 = scmp.eq.s32.totalorder %s26, 0
        // Predicated region
        $region45: #{tpu_custom_call.1} parent=31 // pred_check
          %p234 = pneg %p233
        $region46: #{tpu_custom_call.1} parent=31 // pred_check_branch
          %236 = sbr.rel (%p234) target = $region48
        $region47: #{tpu_custom_call.1} parent=31 // pred_region
          %v237 = vld [vmem:[%s199] sm:$0xff]
          %v238 = vld [vmem:[%s199 + $0x8] sm:$0xff]
          %v239 = vld [vmem:[%s199 + $0x10] sm:$0xff]
          %v240 = vld [vmem:[%s199 + $0x18] sm:$0xff]
          %241 = vst [vmem:[%s229] sm:$0xff] %v237
          %242 = vst [vmem:[%s229 + $0x8] sm:$0xff] %v238
          %243 = vst [vmem:[%s229 + $0x10] sm:$0xff] %v239
          %244 = vst [vmem:[%s229 + $0x18] sm:$0xff] %v240
        $region48: #{tpu_custom_call.1} parent=31 // pred_fallthru
          _
        %s245 = smul.u32 %s26, 96
        %s246 = smul.addr %s245, 4
        %s247 = scalar_lea.vmem [#allocation5], %s246
        %v248 = vld [vmem:[%s247] sm:$0xf]
        %v249 = vld [vmem:[%s247 + $0x4] sm:$0xf]
        %v250 = vld [vmem:[%s247 + $0x8] sm:$0xf]
        %v251 = vld [vmem:[%s247 + $0xc] sm:$0xf]
        %v252 = vld [vmem:[%s247 + $0x10] sm:$0xf]
        %v253 = vld [vmem:[%s247 + $0x14] sm:$0xf]
        %v254 = vld [vmem:[%s247 + $0x18] sm:$0xf]
        %v255 = vld [vmem:[%s247 + $0x1c] sm:$0xf]
        %v256 = vld [vmem:[%s247 + $0x20] sm:$0xf]
        %v257 = vld [vmem:[%s247 + $0x24] sm:$0xf]
        %v258 = vld [vmem:[%s247 + $0x28] sm:$0xf]
        %v259 = vld [vmem:[%s247 + $0x2c] sm:$0xf]
        %v260 = vld [vmem:[%s247 + $0x30] sm:$0xf]
        %v261 = vld [vmem:[%s247 + $0x34] sm:$0xf]
        %v262 = vld [vmem:[%s247 + $0x38] sm:$0xf]
        %v263 = vld [vmem:[%s247 + $0x3c] sm:$0xf]
        %s264 = sadd.s32 16, %s245
        %s265 = smul.addr %s264, 4
        %s266 = scalar_lea.vmem [#allocation5], %s265
        %v267 = vld [vmem:[%s266] sm:$0xf]
        %v268 = vld [vmem:[%s266 + $0x4] sm:$0xf]
        %v269 = vld [vmem:[%s266 + $0x8] sm:$0xf]
        %v270 = vld [vmem:[%s266 + $0xc] sm:$0xf]
        %v271 = vld [vmem:[%s266 + $0x10] sm:$0xf]
        %v272 = vld [vmem:[%s266 + $0x14] sm:$0xf]
        %v273 = vld [vmem:[%s266 + $0x18] sm:$0xf]
        %v274 = vld [vmem:[%s266 + $0x1c] sm:$0xf]
        %v275 = vld [vmem:[%s266 + $0x20] sm:$0xf]
        %v276 = vld [vmem:[%s266 + $0x24] sm:$0xf]
        %v277 = vld [vmem:[%s266 + $0x28] sm:$0xf]
        %v278 = vld [vmem:[%s266 + $0x2c] sm:$0xf]
        %v279 = vld [vmem:[%s266 + $0x30] sm:$0xf]
        %v280 = vld [vmem:[%s266 + $0x34] sm:$0xf]
        %v281 = vld [vmem:[%s266 + $0x38] sm:$0xf]
        %v282 = vld [vmem:[%s266 + $0x3c] sm:$0xf]
        %s283 = sadd.s32 32, %s245
        %s284 = smul.addr %s283, 4
        %s285 = scalar_lea.vmem [#allocation5], %s284
        %v286 = vld [vmem:[%s285] sm:$0xf]
        %v287 = vld [vmem:[%s285 + $0x4] sm:$0xf]
        %v288 = vld [vmem:[%s285 + $0x8] sm:$0xf]
        %v289 = vld [vmem:[%s285 + $0xc] sm:$0xf]
        %v290 = vld [vmem:[%s285 + $0x10] sm:$0xf]
        %v291 = vld [vmem:[%s285 + $0x14] sm:$0xf]
        %v292 = vld [vmem:[%s285 + $0x18] sm:$0xf]
        %v293 = vld [vmem:[%s285 + $0x1c] sm:$0xf]
        %v294 = vld [vmem:[%s285 + $0x20] sm:$0xf]
        %v295 = vld [vmem:[%s285 + $0x24] sm:$0xf]
        %v296 = vld [vmem:[%s285 + $0x28] sm:$0xf]
        %v297 = vld [vmem:[%s285 + $0x2c] sm:$0xf]
        %v298 = vld [vmem:[%s285 + $0x30] sm:$0xf]
        %v299 = vld [vmem:[%s285 + $0x34] sm:$0xf]
        %v300 = vld [vmem:[%s285 + $0x38] sm:$0xf]
        %v301 = vld [vmem:[%s285 + $0x3c] sm:$0xf]
        %s302 = sadd.s32 48, %s245
        %s303 = smul.addr %s302, 4
        %s304 = scalar_lea.vmem [#allocation5], %s303
        %v305 = vld [vmem:[%s304] sm:$0xf]
        %v306 = vld [vmem:[%s304 + $0x4] sm:$0xf]
        %v307 = vld [vmem:[%s304 + $0x8] sm:$0xf]
        %v308 = vld [vmem:[%s304 + $0xc] sm:$0xf]
        %v309 = vld [vmem:[%s304 + $0x10] sm:$0xf]
        %v310 = vld [vmem:[%s304 + $0x14] sm:$0xf]
        %v311 = vld [vmem:[%s304 + $0x18] sm:$0xf]
        %v312 = vld [vmem:[%s304 + $0x1c] sm:$0xf]
        %s313 = sadd.s32 64, %s245
        %s314 = smul.addr %s313, 4
        %s315 = scalar_lea.vmem [#allocation5], %s314
        %v316 = vld [vmem:[%s315] sm:$0xf]
        %v317 = vld [vmem:[%s315 + $0x4] sm:$0xf]
        %v318 = vld [vmem:[%s315 + $0x8] sm:$0xf]
        %v319 = vld [vmem:[%s315 + $0xc] sm:$0xf]
        %v320 = vld [vmem:[%s315 + $0x10] sm:$0xf]
        %v321 = vld [vmem:[%s315 + $0x14] sm:$0xf]
        %v322 = vld [vmem:[%s315 + $0x18] sm:$0xf]
        %v323 = vld [vmem:[%s315 + $0x1c] sm:$0xf]
        %v324 = vld [vmem:[%s315 + $0x20] sm:$0xf]
        %v325 = vld [vmem:[%s315 + $0x24] sm:$0xf]
        %v326 = vld [vmem:[%s315 + $0x28] sm:$0xf]
        %v327 = vld [vmem:[%s315 + $0x2c] sm:$0xf]
        %v328 = vld [vmem:[%s315 + $0x30] sm:$0xf]
        %v329 = vld [vmem:[%s315 + $0x34] sm:$0xf]
        %v330 = vld [vmem:[%s315 + $0x38] sm:$0xf]
        %v331 = vld [vmem:[%s315 + $0x3c] sm:$0xf]
        %s332 = sadd.s32 80, %s245
        %s333 = smul.addr %s332, 4
        %s334 = scalar_lea.vmem [#allocation5], %s333
        %v335 = vld [vmem:[%s334] sm:$0xf]
        %v336 = vld [vmem:[%s334 + $0x4] sm:$0xf]
        %v337 = vld [vmem:[%s334 + $0x8] sm:$0xf]
        %v338 = vld [vmem:[%s334 + $0xc] sm:$0xf]
        %v339 = vld [vmem:[%s334 + $0x10] sm:$0xf]
        %v340 = vld [vmem:[%s334 + $0x14] sm:$0xf]
        %v341 = vld [vmem:[%s334 + $0x18] sm:$0xf]
        %v342 = vld [vmem:[%s334 + $0x1c] sm:$0xf]
        %v343 = vld [vmem:[%s334 + $0x20] sm:$0xf]
        %v344 = vld [vmem:[%s334 + $0x24] sm:$0xf]
        %v345 = vld [vmem:[%s334 + $0x28] sm:$0xf]
        %v346 = vld [vmem:[%s334 + $0x2c] sm:$0xf]
        %v347 = vld [vmem:[%s334 + $0x30] sm:$0xf]
        %v348 = vld [vmem:[%s334 + $0x34] sm:$0xf]
        %v349 = vld [vmem:[%s334 + $0x38] sm:$0xf]
        %v350 = vld [vmem:[%s334 + $0x3c] sm:$0xf]
        %s351 = smul.u32 %s26, 8
        %s352 = scalar_lea.vmem [#allocation7], %s351
        %v353 = vld [vmem:[%s352] sm:$0xff]
        %v354 = vlaneseq
        %v355 = vand.u32 %v354, 127
        %vm356 = vcmp.lt.s32.totalorder %v355, 64
        %v357 = vsel %vm356, 1, 0
        %v358 = vcvt.s32.f32 %v357
        %v359 = vld [vmem:[%s229] sm:$0xff]
        %v360 = vld [vmem:[%s229 + $0x8] sm:$0xff]
        %v361 = vld [vmem:[%s229 + $0x10] sm:$0xff]
        %v362 = vld [vmem:[%s229 + $0x18] sm:$0xff]
        %v363 = vpack.c.bf16 %v360, %v359
        %v364 = vpack.c.bf16 %v362, %v361
        %v381 = vunpack.c.l.b16 %v248
        %v382 = vunpack.c.l.b16 %v249
        %v383 = vunpack.c.l.b16 %v250
        %v384 = vunpack.c.l.b16 %v251
        %v385 = vunpack.c.l.b16 %v252
        %v386 = vunpack.c.l.b16 %v253
        %v387 = vunpack.c.l.b16 %v254
        %v388 = vunpack.c.l.b16 %v255
        %v389 = vunpack.c.l.b16 %v256
        %v390 = vunpack.c.l.b16 %v257
        %v391 = vunpack.c.l.b16 %v258
        %v392 = vunpack.c.l.b16 %v259
        %v393 = vunpack.c.l.b16 %v260
        %v394 = vunpack.c.l.b16 %v261
        %v395 = vunpack.c.l.b16 %v262
        %v396 = vunpack.c.l.b16 %v263
        %v397 = vpack.c.b16 %v382, %v381
        %v398 = vpack.c.b16 %v384, %v383
        %v399 = vpack.c.b16 %v386, %v385
        %v400 = vpack.c.b16 %v388, %v387
        %v401 = vpack.c.b16 %v390, %v389
        %v402 = vpack.c.b16 %v392, %v391
        %v403 = vpack.c.b16 %v394, %v393
        %v404 = vpack.c.b16 %v396, %v395
        %413 = vmatprep.subr.bf16.mxu0 0
        %414 = vmatpush1.bf16.msra.mxu0 %v397
        %415 = vmatprep.subr.bf16.mxu0 0
        %416 = vmatpush1.bf16.msra.mxu0 %v398
        %417 = vmatprep.subr.bf16.mxu0 0
        %418 = vmatpush1.bf16.msra.mxu0 %v399
        %419 = vmatprep.subr.bf16.mxu0 0
        %420 = vmatpush1.bf16.msra.mxu0 %v400
        %421 = vmatprep.subr.bf16.mxu0 0
        %422 = vmatpush1.bf16.msra.mxu0 %v401
        %423 = vmatprep.subr.bf16.mxu0 0
        %424 = vmatpush1.bf16.msra.mxu0 %v402
        %425 = vmatprep.subr.bf16.mxu0 0
        %426 = vmatpush1.bf16.msra.mxu0 %v403
        %427 = vmatprep.subr.bf16.mxu0 0
        %428 = vmatpush1.bf16.msra.mxu0 %v404
        %429 = vmatprep.subr.bf16.mxu0 0
        %430 = vmatpush1.bf16.msra.mxu0 0
        %431 = vmatprep.subr.bf16.mxu0 0
        %432 = vmatpush1.bf16.msra.mxu0 0
        %433 = vmatprep.subr.bf16.mxu0 0
        %434 = vmatpush1.bf16.msra.mxu0 0
        %435 = vmatprep.subr.bf16.mxu0 0
        %436 = vmatpush1.bf16.msra.mxu0 0
        %437 = vmatprep.subr.bf16.mxu0 0
        %438 = vmatpush1.bf16.msra.mxu0 0
        %439 = vmatprep.subr.bf16.mxu0 0
        %440 = vmatpush1.bf16.msra.mxu0 0
        %441 = vmatprep.subr.bf16.mxu0 0
        %442 = vmatpush1.bf16.msra.mxu0 0
        %443 = vmatprep.subr.bf16.mxu0 0
        %444 = vmatpush1.bf16.msra.mxu0 0
        %445 = vmatprep.mubr.bf16.mxu0 0
        %446 = vmatmul.mubr.bf16.gmra.mrb[0].mxu0 %v363
        %v447 = vpop.f32.mrb[0].mxu0
        %v448 = vadd.f32 0.0, %v447
        %v449 = vpop.f32.mrb[0].mxu0
        %v450 = vpop.f32.mrb[0].mxu0
        %v451 = vadd.f32 0.0, %v450
        %v452 = vpop.f32.mrb[0].mxu0
        %453 = vmatprep.mubr.bf16.mxu0 0
        %454 = vmatmul.mubr.bf16.gmra.mrb[0].mxu0 %v364
        %v455 = vpop.f32.mrb[0].mxu0
        %v456 = vadd.f32 0.0, %v455
        %v457 = vpop.f32.mrb[0].mxu0
        %v458 = vpop.f32.mrb[0].mxu0
        %v459 = vadd.f32 0.0, %v458
        %v460 = vpop.f32.mrb[0].mxu0
        %461 = vdwg.mxu0
        %v478 = vunpack.c.l.b16 %v267
        %v479 = vunpack.c.l.b16 %v268
        %v480 = vunpack.c.l.b16 %v269
        %v481 = vunpack.c.l.b16 %v270
        %v482 = vunpack.c.l.b16 %v271
        %v483 = vunpack.c.l.b16 %v272
        %v484 = vunpack.c.l.b16 %v273
        %v485 = vunpack.c.l.b16 %v274
        %v486 = vunpack.c.l.b16 %v275
        %v487 = vunpack.c.l.b16 %v276
        %v488 = vunpack.c.l.b16 %v277
        %v489 = vunpack.c.l.b16 %v278
        %v490 = vunpack.c.l.b16 %v279
        %v491 = vunpack.c.l.b16 %v280
        %v492 = vunpack.c.l.b16 %v281
        %v493 = vunpack.c.l.b16 %v282
        %v494 = vpack.c.b16 %v479, %v478
        %v495 = vpack.c.b16 %v481, %v480
        %v496 = vpack.c.b16 %v483, %v482
        %v497 = vpack.c.b16 %v485, %v484
        %v498 = vpack.c.b16 %v487, %v486
        %v499 = vpack.c.b16 %v489, %v488
        %v500 = vpack.c.b16 %v491, %v490
        %v501 = vpack.c.b16 %v493, %v492
        %510 = vmatprep.subr.bf16.mxu0 0
        %511 = vmatpush1.bf16.msra.mxu0 %v494
        %512 = vmatprep.subr.bf16.mxu0 0
        %513 = vmatpush1.bf16.msra.mxu0 %v495
        %514 = vmatprep.subr.bf16.mxu0 0
        %515 = vmatpush1.bf16.msra.mxu0 %v496
        %516 = vmatprep.subr.bf16.mxu0 0
        %517 = vmatpush1.bf16.msra.mxu0 %v497
        %518 = vmatprep.subr.bf16.mxu0 0
        %519 = vmatpush1.bf16.msra.mxu0 %v498
        %520 = vmatprep.subr.bf16.mxu0 0
        %521 = vmatpush1.bf16.msra.mxu0 %v499
        %522 = vmatprep.subr.bf16.mxu0 0
        %523 = vmatpush1.bf16.msra.mxu0 %v500
        %524 = vmatprep.subr.bf16.mxu0 0
        %525 = vmatpush1.bf16.msra.mxu0 %v501
        %526 = vmatprep.subr.bf16.mxu0 0
        %527 = vmatpush1.bf16.msra.mxu0 0
        %528 = vmatprep.subr.bf16.mxu0 0
        %529 = vmatpush1.bf16.msra.mxu0 0
        %530 = vmatprep.subr.bf16.mxu0 0
        %531 = vmatpush1.bf16.msra.mxu0 0
        %532 = vmatprep.subr.bf16.mxu0 0
        %533 = vmatpush1.bf16.msra.mxu0 0
        %534 = vmatprep.subr.bf16.mxu0 0
        %535 = vmatpush1.bf16.msra.mxu0 0
        %536 = vmatprep.subr.bf16.mxu0 0
        %537 = vmatpush1.bf16.msra.mxu0 0
        %538 = vmatprep.subr.bf16.mxu0 0
        %539 = vmatpush1.bf16.msra.mxu0 0
        %540 = vmatprep.subr.bf16.mxu0 0
        %541 = vmatpush1.bf16.msra.mxu0 0
        %542 = vmatprep.mubr.bf16.mxu0 0
        %543 = vmatmul.mubr.bf16.gmra.mrb[0].mxu0 %v363
        %v544 = vpop.f32.mrb[0].mxu0
        %v545 = vadd.f32 0.0, %v544
        %v546 = vpop.f32.mrb[0].mxu0
        %v547 = vpop.f32.mrb[0].mxu0
        %v548 = vadd.f32 0.0, %v547
        %v549 = vpop.f32.mrb[0].mxu0
        %550 = vmatprep.mubr.bf16.mxu0 0
        %551 = vmatmul.mubr.bf16.gmra.mrb[0].mxu0 %v364
        %v552 = vpop.f32.mrb[0].mxu0
        %v553 = vadd.f32 0.0, %v552
        %v554 = vpop.f32.mrb[0].mxu0
        %v555 = vpop.f32.mrb[0].mxu0
        %v556 = vadd.f32 0.0, %v555
        %v557 = vpop.f32.mrb[0].mxu0
        %558 = vdwg.mxu0
        %v575 = vunpack.c.l.b16 %v286
        %v576 = vunpack.c.l.b16 %v287
        %v577 = vunpack.c.l.b16 %v288
        %v578 = vunpack.c.l.b16 %v289
        %v579 = vunpack.c.l.b16 %v290
        %v580 = vunpack.c.l.b16 %v291
        %v581 = vunpack.c.l.b16 %v292
        %v582 = vunpack.c.l.b16 %v293
        %v583 = vunpack.c.l.b16 %v294
        %v584 = vunpack.c.l.b16 %v295
        %v585 = vunpack.c.l.b16 %v296
        %v586 = vunpack.c.l.b16 %v297
        %v587 = vunpack.c.l.b16 %v298
        %v588 = vunpack.c.l.b16 %v299
        %v589 = vunpack.c.l.b16 %v300
        %v590 = vunpack.c.l.b16 %v301
        %v591 = vpack.c.b16 %v576, %v575
        %v592 = vpack.c.b16 %v578, %v577
        %v593 = vpack.c.b16 %v580, %v579
        %v594 = vpack.c.b16 %v582, %v581
        %v595 = vpack.c.b16 %v584, %v583
        %v596 = vpack.c.b16 %v586, %v585
        %v597 = vpack.c.b16 %v588, %v587
        %v598 = vpack.c.b16 %v590, %v589
        %607 = vmatprep.subr.bf16.mxu0 0
        %608 = vmatpush1.bf16.msra.mxu0 %v591
        %609 = vmatprep.subr.bf16.mxu0 0
        %610 = vmatpush1.bf16.msra.mxu0 %v592
        %611 = vmatprep.subr.bf16.mxu0 0
        %612 = vmatpush1.bf16.msra.mxu0 %v593
        %613 = vmatprep.subr.bf16.mxu0 0
        %614 = vmatpush1.bf16.msra.mxu0 %v594
        %615 = vmatprep.subr.bf16.mxu0 0
        %616 = vmatpush1.bf16.msra.mxu0 %v595
        %617 = vmatprep.subr.bf16.mxu0 0
        %618 = vmatpush1.bf16.msra.mxu0 %v596
        %619 = vmatprep.subr.bf16.mxu0 0
        %620 = vmatpush1.bf16.msra.mxu0 %v597
        %621 = vmatprep.subr.bf16.mxu0 0
        %622 = vmatpush1.bf16.msra.mxu0 %v598
        %623 = vmatprep.subr.bf16.mxu0 0
        %624 = vmatpush1.bf16.msra.mxu0 0
        %625 = vmatprep.subr.bf16.mxu0 0
        %626 = vmatpush1.bf16.msra.mxu0 0
        %627 = vmatprep.subr.bf16.mxu0 0
        %628 = vmatpush1.bf16.msra.mxu0 0
        %629 = vmatprep.subr.bf16.mxu0 0
        %630 = vmatpush1.bf16.msra.mxu0 0
        %631 = vmatprep.subr.bf16.mxu0 0
        %632 = vmatpush1.bf16.msra.mxu0 0
        %633 = vmatprep.subr.bf16.mxu0 0
        %634 = vmatpush1.bf16.msra.mxu0 0
        %635 = vmatprep.subr.bf16.mxu0 0
        %636 = vmatpush1.bf16.msra.mxu0 0
        %637 = vmatprep.subr.bf16.mxu0 0
        %638 = vmatpush1.bf16.msra.mxu0 0
        %639 = vmatprep.mubr.bf16.mxu0 0
        %640 = vmatmul.mubr.bf16.gmra.mrb[0].mxu0 %v363
        %v641 = vpop.f32.mrb[0].mxu0
        %v642 = vadd.f32 0.0, %v641
        %v643 = vpop.f32.mrb[0].mxu0
        %v644 = vpop.f32.mrb[0].mxu0
        %v645 = vadd.f32 0.0, %v644
        %v646 = vpop.f32.mrb[0].mxu0
        %647 = vmatprep.mubr.bf16.mxu0 0
        %648 = vmatmul.mubr.bf16.gmra.mrb[0].mxu0 %v364
        %v649 = vpop.f32.mrb[0].mxu0
        %v650 = vadd.f32 0.0, %v649
        %v651 = vpop.f32.mrb[0].mxu0
        %v652 = vpop.f32.mrb[0].mxu0
        %v653 = vadd.f32 0.0, %v652
        %v654 = vpop.f32.mrb[0].mxu0
        %655 = vdwg.mxu0
        %v656 = vpack.c.bf16 %v448, %v448
        %v657 = vpack.c.bf16 %v451, %v451
        %v658 = vpack.c.bf16 %v456, %v456
        %v659 = vpack.c.bf16 %v459, %v459
        %v660 = vpack.c.bf16 %v545, %v545
        %v661 = vpack.c.bf16 %v548, %v548
        %v662 = vpack.c.bf16 %v553, %v553
        %v663 = vpack.c.bf16 %v556, %v556
        %v664 = vpack.c.bf16 %v642, %v642
        %v665 = vpack.c.bf16 %v645, %v645
        %v666 = vpack.c.bf16 %v650, %v650
        %v667 = vpack.c.bf16 %v653, %v653
        %vm668 = vcmask 261120
        %v670 = vsel %vm668, %v656, 0
        %v673 = vsel %vm668, %v660, 0
        %675 = vmatprep.subr.bf16.mxu0 0
        %676 = vmatpush1.bf16.xpose.msra.mxu0 %v673
        %677 = vmatprep.subr.bf16.mxu0 0
        %678 = vmatpush1.bf16.xpose.msra.mxu0 0
        %679 = vmatprep.subr.bf16.mxu0 0
        %680 = vmatpush1.bf16.xpose.msra.mxu0 0
        %681 = vmatprep.subr.bf16.mxu0 0
        %682 = vmatpush1.bf16.xpose.msra.mxu0 0
        %683 = vmatprep.subr.bf16.mxu0 0
        %684 = vmatpush1.bf16.xpose.msra.mxu0 0
        %685 = vmatprep.subr.bf16.mxu0 0
        %686 = vmatpush1.bf16.xpose.msra.mxu0 0
        %687 = vmatprep.subr.bf16.mxu0 0
        %688 = vmatpush1.bf16.xpose.msra.mxu0 0
        %689 = vmatprep.subr.bf16.mxu0 0
        %690 = vmatpush1.bf16.xpose.msra.mxu0 0
        %691 = vmatprep.subr.bf16.mxu0 0
        %692 = vmatpush1.bf16.xpose.msra.mxu0 0
        %693 = vmatprep.subr.bf16.mxu0 0
        %694 = vmatpush1.bf16.xpose.msra.mxu0 0
        %695 = vmatprep.subr.bf16.mxu0 0
        %696 = vmatpush1.bf16.xpose.msra.mxu0 0
        %697 = vmatprep.subr.bf16.mxu0 0
        %698 = vmatpush1.bf16.xpose.msra.mxu0 0
        %699 = vmatprep.subr.bf16.mxu0 0
        %700 = vmatpush1.bf16.xpose.msra.mxu0 0
        %701 = vmatprep.subr.bf16.mxu0 0
        %702 = vmatpush1.bf16.xpose.msra.mxu0 0
        %703 = vmatprep.subr.bf16.mxu0 0
        %704 = vmatpush1.bf16.xpose.msra.mxu0 0
        %705 = vmatprep.subr.bf16.mxu0 0
        %706 = vmatpush1.bf16.xpose.msra.mxu0 0
        %707 = vmatprep.mubr.bf16.mxu0 0
        %708 = vmatmul.mubr.bf16.gmra.mrb[0].mxu0 %v670
        %v709 = vpop.f32.mrb[0].mxu0
        %v710 = vadd.f32 0.0, %v709
        %v711 = vpop.f32.mrb[0].mxu0
        %v712 = vpop.f32.mrb[0].mxu0
        %v713 = vpop.f32.mrb[0].mxu0
        %714 = vdwg.mxu0
        %v716 = vsel %vm668, %v657, 0
        %v719 = vsel %vm668, %v661, 0
        %721 = vmatprep.subr.bf16.mxu0 0
        %722 = vmatpush1.bf16.xpose.msra.mxu0 %v719
        %723 = vmatprep.subr.bf16.mxu0 0
        %724 = vmatpush1.bf16.xpose.msra.mxu0 0
        %725 = vmatprep.subr.bf16.mxu0 0
        %726 = vmatpush1.bf16.xpose.msra.mxu0 0
        %727 = vmatprep.subr.bf16.mxu0 0
        %728 = vmatpush1.bf16.xpose.msra.mxu0 0
        %729 = vmatprep.subr.bf16.mxu0 0
        %730 = vmatpush1.bf16.xpose.msra.mxu0 0
        %731 = vmatprep.subr.bf16.mxu0 0
        %732 = vmatpush1.bf16.xpose.msra.mxu0 0
        %733 = vmatprep.subr.bf16.mxu0 0
        %734 = vmatpush1.bf16.xpose.msra.mxu0 0
        %735 = vmatprep.subr.bf16.mxu0 0
        %736 = vmatpush1.bf16.xpose.msra.mxu0 0
        %737 = vmatprep.subr.bf16.mxu0 0
        %738 = vmatpush1.bf16.xpose.msra.mxu0 0
        %739 = vmatprep.subr.bf16.mxu0 0
        %740 = vmatpush1.bf16.xpose.msra.mxu0 0
        %741 = vmatprep.subr.bf16.mxu0 0
        %742 = vmatpush1.bf16.xpose.msra.mxu0 0
        %743 = vmatprep.subr.bf16.mxu0 0
        %744 = vmatpush1.bf16.xpose.msra.mxu0 0
        %745 = vmatprep.subr.bf16.mxu0 0
        %746 = vmatpush1.bf16.xpose.msra.mxu0 0
        %747 = vmatprep.subr.bf16.mxu0 0
        %748 = vmatpush1.bf16.xpose.msra.mxu0 0
        %749 = vmatprep.subr.bf16.mxu0 0
        %750 = vmatpush1.bf16.xpose.msra.mxu0 0
        %751 = vmatprep.subr.bf16.mxu0 0
        %752 = vmatpush1.bf16.xpose.msra.mxu0 0
        %753 = vmatprep.mubr.bf16.mxu0 0
        %754 = vmatmul.mubr.bf16.gmra.mrb[0].mxu0 %v716
        %v755 = vpop.f32.mrb[0].mxu0
        %v756 = vadd.f32 0.0, %v755
        %v757 = vpop.f32.mrb[0].mxu0
        %v758 = vpop.f32.mrb[0].mxu0
        %v759 = vpop.f32.mrb[0].mxu0
        %760 = vdwg.mxu0
        %v762 = vsel %vm668, %v658, 0
        %v765 = vsel %vm668, %v662, 0
        %767 = vmatprep.subr.bf16.mxu0 0
        %768 = vmatpush1.bf16.xpose.msra.mxu0 %v765
        %769 = vmatprep.subr.bf16.mxu0 0
        %770 = vmatpush1.bf16.xpose.msra.mxu0 0
        %771 = vmatprep.subr.bf16.mxu0 0
        %772 = vmatpush1.bf16.xpose.msra.mxu0 0
        %773 = vmatprep.subr.bf16.mxu0 0
        %774 = vmatpush1.bf16.xpose.msra.mxu0 0
        %775 = vmatprep.subr.bf16.mxu0 0
        %776 = vmatpush1.bf16.xpose.msra.mxu0 0
        %777 = vmatprep.subr.bf16.mxu0 0
        %778 = vmatpush1.bf16.xpose.msra.mxu0 0
        %779 = vmatprep.subr.bf16.mxu0 0
        %780 = vmatpush1.bf16.xpose.msra.mxu0 0
        %781 = vmatprep.subr.bf16.mxu0 0
        %782 = vmatpush1.bf16.xpose.msra.mxu0 0
        %783 = vmatprep.subr.bf16.mxu0 0
        %784 = vmatpush1.bf16.xpose.msra.mxu0 0
        %785 = vmatprep.subr.bf16.mxu0 0
        %786 = vmatpush1.bf16.xpose.msra.mxu0 0
        %787 = vmatprep.subr.bf16.mxu0 0
        %788 = vmatpush1.bf16.xpose.msra.mxu0 0
        %789 = vmatprep.subr.bf16.mxu0 0
        %790 = vmatpush1.bf16.xpose.msra.mxu0 0
        %791 = vmatprep.subr.bf16.mxu0 0
        %792 = vmatpush1.bf16.xpose.msra.mxu0 0
        %793 = vmatprep.subr.bf16.mxu0 0
        %794 = vmatpush1.bf16.xpose.msra.mxu0 0
        %795 = vmatprep.subr.bf16.mxu0 0
        %796 = vmatpush1.bf16.xpose.msra.mxu0 0
        %797 = vmatprep.subr.bf16.mxu0 0
        %798 = vmatpush1.bf16.xpose.msra.mxu0 0
        %799 = vmatprep.mubr.bf16.mxu0 0
        %800 = vmatmul.mubr.bf16.gmra.mrb[0].mxu0 %v762
        %v801 = vpop.f32.mrb[0].mxu0
        %v802 = vadd.f32 0.0, %v801
        %v803 = vpop.f32.mrb[0].mxu0
        %v804 = vpop.f32.mrb[0].mxu0
        %v805 = vpop.f32.mrb[0].mxu0
        %806 = vdwg.mxu0
        %v808 = vsel %vm668, %v659, 0
        %v811 = vsel %vm668, %v663, 0
        %813 = vmatprep.subr.bf16.mxu0 0
        %814 = vmatpush1.bf16.xpose.msra.mxu0 %v811
        %815 = vmatprep.subr.bf16.mxu0 0
        %816 = vmatpush1.bf16.xpose.msra.mxu0 0
        %817 = vmatprep.subr.bf16.mxu0 0
        %818 = vmatpush1.bf16.xpose.msra.mxu0 0
        %819 = vmatprep.subr.bf16.mxu0 0
        %820 = vmatpush1.bf16.xpose.msra.mxu0 0
        %821 = vmatprep.subr.bf16.mxu0 0
        %822 = vmatpush1.bf16.xpose.msra.mxu0 0
        %823 = vmatprep.subr.bf16.mxu0 0
        %824 = vmatpush1.bf16.xpose.msra.mxu0 0
        %825 = vmatprep.subr.bf16.mxu0 0
        %826 = vmatpush1.bf16.xpose.msra.mxu0 0
        %827 = vmatprep.subr.bf16.mxu0 0
        %828 = vmatpush1.bf16.xpose.msra.mxu0 0
        %829 = vmatprep.subr.bf16.mxu0 0
        %830 = vmatpush1.bf16.xpose.msra.mxu0 0
        %831 = vmatprep.subr.bf16.mxu0 0
        %832 = vmatpush1.bf16.xpose.msra.mxu0 0
        %833 = vmatprep.subr.bf16.mxu0 0
        %834 = vmatpush1.bf16.xpose.msra.mxu0 0
        %835 = vmatprep.subr.bf16.mxu0 0
        %836 = vmatpush1.bf16.xpose.msra.mxu0 0
        %837 = vmatprep.subr.bf16.mxu0 0
        %838 = vmatpush1.bf16.xpose.msra.mxu0 0
        %839 = vmatprep.subr.bf16.mxu0 0
        %840 = vmatpush1.bf16.xpose.msra.mxu0 0
        %841 = vmatprep.subr.bf16.mxu0 0
        %842 = vmatpush1.bf16.xpose.msra.mxu0 0
        %843 = vmatprep.subr.bf16.mxu0 0
        %844 = vmatpush1.bf16.xpose.msra.mxu0 0
        %845 = vmatprep.mubr.bf16.mxu0 0
        %846 = vmatmul.mubr.bf16.gmra.mrb[0].mxu0 %v808
        %v847 = vpop.f32.mrb[0].mxu0
        %v848 = vadd.f32 0.0, %v847
        %v849 = vpop.f32.mrb[0].mxu0
        %v850 = vpop.f32.mrb[0].mxu0
        %v851 = vpop.f32.mrb[0].mxu0
        %852 = vdwg.mxu0
        %vm853 = vcmask 64512
        %v854 = vsel %vm853, %v710, -inf
        %855 = vmax.xlane.f32.xlu0 %v854
        %v856 = vpop.xlane.xlu0 %855
        %v857 = vsel %vm853, %v756, -inf
        %858 = vmax.xlane.f32.xlu0 %v857
        %v859 = vpop.xlane.xlu0 %858
        %v860 = vsel %vm853, %v802, -inf
        %861 = vmax.xlane.f32.xlu0 %v860
        %v862 = vpop.xlane.xlu0 %861
        %v863 = vsel %vm853, %v848, -inf
        %864 = vmax.xlane.f32.xlu0 %v863
        %v865 = vpop.xlane.xlu0 %864
        %v866 = vsub.f32 %v710, %v856
        %v867 = vsub.f32 %v756, %v859
        %v868 = vsub.f32 %v802, %v862
        %v869 = vsub.f32 %v848, %v865
        %v870 = vmul.f32 %v866, 1.442695
        %v871 = vpow.pop %v870
        %v872 = vmul.f32 %v867, 1.442695
        %v873 = vpow.pop %v872
        %v874 = vmul.f32 %v868, 1.442695
        %v875 = vpow.pop %v874
        %v876 = vmul.f32 %v869, 1.442695
        %v877 = vpow.pop %v876
        %v878 = vsel %vm853, %v871, 0.0
        %879 = vadd.xlane.f32.xlu0 %v878
        %v880 = vpop.xlane.xlu0 %879
        %v881 = vsel %vm853, %v873, 0.0
        %882 = vadd.xlane.f32.xlu0 %v881
        %v883 = vpop.xlane.xlu0 %882
        %v884 = vsel %vm853, %v875, 0.0
        %885 = vadd.xlane.f32.xlu0 %v884
        %v886 = vpop.xlane.xlu0 %885
        %v887 = vsel %vm853, %v877, 0.0
        %888 = vadd.xlane.f32.xlu0 %v887
        %v889 = vpop.xlane.xlu0 %888
        %v890 = vrcp.pop %v880
        %v891 = vmul.f32 %v871, %v890
        %v892 = vrcp.pop %v883
        %v893 = vmul.f32 %v873, %v892
        %v894 = vrcp.pop %v886
        %v895 = vmul.f32 %v875, %v894
        %v896 = vrcp.pop %v889
        %v897 = vmul.f32 %v877, %v896
        %v898 = vpack.c.bf16 %v891, %v891
        %v899 = vpack.c.bf16 %v893, %v893
        %v900 = vpack.c.bf16 %v895, %v895
        %v901 = vpack.c.bf16 %v897, %v897
        %v903 = vsel %vm853, %v898, 0
        %vm905 = vcmask 1043456
        %v907 = vsel %vm905, %v664, 0
        %909 = vmatprep.subr.bf16.mxu0 0
        %910 = vmatpush1.bf16.msra.mxu0 %v907
        %911 = vmatprep.subr.bf16.mxu0 0
        %912 = vmatpush1.bf16.msra.mxu0 0
        %913 = vmatprep.subr.bf16.mxu0 0
        %914 = vmatpush1.bf16.msra.mxu0 0
        %915 = vmatprep.subr.bf16.mxu0 0
        %916 = vmatpush1.bf16.msra.mxu0 0
        %917 = vmatprep.subr.bf16.mxu0 0
        %918 = vmatpush1.bf16.msra.mxu0 0
        %919 = vmatprep.subr.bf16.mxu0 0
        %920 = vmatpush1.bf16.msra.mxu0 0
        %921 = vmatprep.subr.bf16.mxu0 0
        %922 = vmatpush1.bf16.msra.mxu0 0
        %923 = vmatprep.subr.bf16.mxu0 0
        %924 = vmatpush1.bf16.msra.mxu0 0
        %925 = vmatprep.subr.bf16.mxu0 0
        %926 = vmatpush1.bf16.msra.mxu0 0
        %927 = vmatprep.subr.bf16.mxu0 0
        %928 = vmatpush1.bf16.msra.mxu0 0
        %929 = vmatprep.subr.bf16.mxu0 0
        %930 = vmatpush1.bf16.msra.mxu0 0
        %931 = vmatprep.subr.bf16.mxu0 0
        %932 = vmatpush1.bf16.msra.mxu0 0
        %933 = vmatprep.subr.bf16.mxu0 0
        %934 = vmatpush1.bf16.msra.mxu0 0
        %935 = vmatprep.subr.bf16.mxu0 0
        %936 = vmatpush1.bf16.msra.mxu0 0
        %937 = vmatprep.subr.bf16.mxu0 0
        %938 = vmatpush1.bf16.msra.mxu0 0
        %939 = vmatprep.subr.bf16.mxu0 0
        %940 = vmatpush1.bf16.msra.mxu0 0
        %941 = vmatprep.mubr.bf16.mxu0 0
        %942 = vmatmul.mubr.bf16.gmra.mrb[0].mxu0 %v903
        %v943 = vpop.f32.mrb[0].mxu0
        %v944 = vadd.f32 0.0, %v943
        %v945 = vpop.f32.mrb[0].mxu0
        %v946 = vpop.f32.mrb[0].mxu0
        %v947 = vpop.f32.mrb[0].mxu0
        %948 = vdwg.mxu0
        %v950 = vsel %vm853, %v899, 0
        %v953 = vsel %vm905, %v665, 0
        %955 = vmatprep.subr.bf16.mxu0 0
        %956 = vmatpush1.bf16.msra.mxu0 %v953
        %957 = vmatprep.subr.bf16.mxu0 0
        %958 = vmatpush1.bf16.msra.mxu0 0
        %959 = vmatprep.subr.bf16.mxu0 0
        %960 = vmatpush1.bf16.msra.mxu0 0
        %961 = vmatprep.subr.bf16.mxu0 0
        %962 = vmatpush1.bf16.msra.mxu0 0
        %963 = vmatprep.subr.bf16.mxu0 0
        %964 = vmatpush1.bf16.msra.mxu0 0
        %965 = vmatprep.subr.bf16.mxu0 0
        %966 = vmatpush1.bf16.msra.mxu0 0
        %967 = vmatprep.subr.bf16.mxu0 0
        %968 = vmatpush1.bf16.msra.mxu0 0
        %969 = vmatprep.subr.bf16.mxu0 0
        %970 = vmatpush1.bf16.msra.mxu0 0
        %971 = vmatprep.subr.bf16.mxu0 0
        %972 = vmatpush1.bf16.msra.mxu0 0
        %973 = vmatprep.subr.bf16.mxu0 0
        %974 = vmatpush1.bf16.msra.mxu0 0
        %975 = vmatprep.subr.bf16.mxu0 0
        %976 = vmatpush1.bf16.msra.mxu0 0
        %977 = vmatprep.subr.bf16.mxu0 0
        %978 = vmatpush1.bf16.msra.mxu0 0
        %979 = vmatprep.subr.bf16.mxu0 0
        %980 = vmatpush1.bf16.msra.mxu0 0
        %981 = vmatprep.subr.bf16.mxu0 0
        %982 = vmatpush1.bf16.msra.mxu0 0
        %983 = vmatprep.subr.bf16.mxu0 0
        %984 = vmatpush1.bf16.msra.mxu0 0
        %985 = vmatprep.subr.bf16.mxu0 0
        %986 = vmatpush1.bf16.msra.mxu0 0
        %987 = vmatprep.mubr.bf16.mxu0 0
        %988 = vmatmul.mubr.bf16.gmra.mrb[0].mxu0 %v950
        %v989 = vpop.f32.mrb[0].mxu0
        %v990 = vadd.f32 0.0, %v989
        %v991 = vpop.f32.mrb[0].mxu0
        %v992 = vpop.f32.mrb[0].mxu0
        %v993 = vpop.f32.mrb[0].mxu0
        %994 = vdwg.mxu0
        %v996 = vsel %vm853, %v900, 0
        %v999 = vsel %vm905, %v666, 0
        %1001 = vmatprep.subr.bf16.mxu0 0
        %1002 = vmatpush1.bf16.msra.mxu0 %v999
        %1003 = vmatprep.subr.bf16.mxu0 0
        %1004 = vmatpush1.bf16.msra.mxu0 0
        %1005 = vmatprep.subr.bf16.mxu0 0
        %1006 = vmatpush1.bf16.msra.mxu0 0
        %1007 = vmatprep.subr.bf16.mxu0 0
        %1008 = vmatpush1.bf16.msra.mxu0 0
        %1009 = vmatprep.subr.bf16.mxu0 0
        %1010 = vmatpush1.bf16.msra.mxu0 0
        %1011 = vmatprep.subr.bf16.mxu0 0
        %1012 = vmatpush1.bf16.msra.mxu0 0
        %1013 = vmatprep.subr.bf16.mxu0 0
        %1014 = vmatpush1.bf16.msra.mxu0 0
        %1015 = vmatprep.subr.bf16.mxu0 0
        %1016 = vmatpush1.bf16.msra.mxu0 0
        %1017 = vmatprep.subr.bf16.mxu0 0
        %1018 = vmatpush1.bf16.msra.mxu0 0
        %1019 = vmatprep.subr.bf16.mxu0 0
        %1020 = vmatpush1.bf16.msra.mxu0 0
        %1021 = vmatprep.subr.bf16.mxu0 0
        %1022 = vmatpush1.bf16.msra.mxu0 0
        %1023 = vmatprep.subr.bf16.mxu0 0
        %1024 = vmatpush1.bf16.msra.mxu0 0
        %1025 = vmatprep.subr.bf16.mxu0 0
        %1026 = vmatpush1.bf16.msra.mxu0 0
        %1027 = vmatprep.subr.bf16.mxu0 0
        %1028 = vmatpush1.bf16.msra.mxu0 0
        %1029 = vmatprep.subr.bf16.mxu0 0
        %1030 = vmatpush1.bf16.msra.mxu0 0
        %1031 = vmatprep.subr.bf16.mxu0 0
        %1032 = vmatpush1.bf16.msra.mxu0 0
        %1033 = vmatprep.mubr.bf16.mxu0 0
        %1034 = vmatmul.mubr.bf16.gmra.mrb[0].mxu0 %v996
        %v1035 = vpop.f32.mrb[0].mxu0
        %v1036 = vadd.f32 0.0, %v1035
        %v1037 = vpop.f32.mrb[0].mxu0
        %v1038 = vpop.f32.mrb[0].mxu0
        %v1039 = vpop.f32.mrb[0].mxu0
        %1040 = vdwg.mxu0
        %v1042 = vsel %vm853, %v901, 0
        %v1045 = vsel %vm905, %v667, 0
        %1047 = vmatprep.subr.bf16.mxu0 0
        %1048 = vmatpush1.bf16.msra.mxu0 %v1045
        %1049 = vmatprep.subr.bf16.mxu0 0
        %1050 = vmatpush1.bf16.msra.mxu0 0
        %1051 = vmatprep.subr.bf16.mxu0 0
        %1052 = vmatpush1.bf16.msra.mxu0 0
        %1053 = vmatprep.subr.bf16.mxu0 0
        %1054 = vmatpush1.bf16.msra.mxu0 0
        %1055 = vmatprep.subr.bf16.mxu0 0
        %1056 = vmatpush1.bf16.msra.mxu0 0
        %1057 = vmatprep.subr.bf16.mxu0 0
        %1058 = vmatpush1.bf16.msra.mxu0 0
        %1059 = vmatprep.subr.bf16.mxu0 0
        %1060 = vmatpush1.bf16.msra.mxu0 0
        %1061 = vmatprep.subr.bf16.mxu0 0
        %1062 = vmatpush1.bf16.msra.mxu0 0
        %1063 = vmatprep.subr.bf16.mxu0 0
        %1064 = vmatpush1.bf16.msra.mxu0 0
        %1065 = vmatprep.subr.bf16.mxu0 0
        %1066 = vmatpush1.bf16.msra.mxu0 0
        %1067 = vmatprep.subr.bf16.mxu0 0
        %1068 = vmatpush1.bf16.msra.mxu0 0
        %1069 = vmatprep.subr.bf16.mxu0 0
        %1070 = vmatpush1.bf16.msra.mxu0 0
        %1071 = vmatprep.subr.bf16.mxu0 0
        %1072 = vmatpush1.bf16.msra.mxu0 0
        %1073 = vmatprep.subr.bf16.mxu0 0
        %1074 = vmatpush1.bf16.msra.mxu0 0
        %1075 = vmatprep.subr.bf16.mxu0 0
        %1076 = vmatpush1.bf16.msra.mxu0 0
        %1077 = vmatprep.subr.bf16.mxu0 0
        %1078 = vmatpush1.bf16.msra.mxu0 0
        %1079 = vmatprep.mubr.bf16.mxu0 0
        %1080 = vmatmul.mubr.bf16.gmra.mrb[0].mxu0 %v1042
        %v1081 = vpop.f32.mrb[0].mxu0
        %v1082 = vadd.f32 0.0, %v1081
        %v1083 = vpop.f32.mrb[0].mxu0
        %v1084 = vpop.f32.mrb[0].mxu0
        %v1085 = vpop.f32.mrb[0].mxu0
        %1086 = vdwg.mxu0
        %1088 = vrot.lane.b32.xlu0 %v656, 96
        %v1089 = vpop.permute.xlu0 %1088
        %1091 = vrot.lane.b32.xlu0 %v660, 96
        %v1092 = vpop.permute.xlu0 %1091
        %v1094 = vsel %vm668, %v1089, 0
        %v1097 = vsel %vm668, %v1092, 0
        %1099 = vmatprep.subr.bf16.mxu0 0
        %1100 = vmatpush1.bf16.xpose.msra.mxu0 %v1097
        %1101 = vmatprep.subr.bf16.mxu0 0
        %1102 = vmatpush1.bf16.xpose.msra.mxu0 0
        %1103 = vmatprep.subr.bf16.mxu0 0
        %1104 = vmatpush1.bf16.xpose.msra.mxu0 0
        %1105 = vmatprep.subr.bf16.mxu0 0
        %1106 = vmatpush1.bf16.xpose.msra.mxu0 0
        %1107 = vmatprep.subr.bf16.mxu0 0
        %1108 = vmatpush1.bf16.xpose.msra.mxu0 0
        %1109 = vmatprep.subr.bf16.mxu0 0
        %1110 = vmatpush1.bf16.xpose.msra.mxu0 0
        %1111 = vmatprep.subr.bf16.mxu0 0
        %1112 = vmatpush1.bf16.xpose.msra.mxu0 0
        %1113 = vmatprep.subr.bf16.mxu0 0
        %1114 = vmatpush1.bf16.xpose.msra.mxu0 0
        %1115 = vmatprep.subr.bf16.mxu0 0
        %1116 = vmatpush1.bf16.xpose.msra.mxu0 0
        %1117 = vmatprep.subr.bf16.mxu0 0
        %1118 = vmatpush1.bf16.xpose.msra.mxu0 0
        %1119 = vmatprep.subr.bf16.mxu0 0
        %1120 = vmatpush1.bf16.xpose.msra.mxu0 0
        %1121 = vmatprep.subr.bf16.mxu0 0
        %1122 = vmatpush1.bf16.xpose.msra.mxu0 0
        %1123 = vmatprep.subr.bf16.mxu0 0
        %1124 = vmatpush1.bf16.xpose.msra.mxu0 0
        %1125 = vmatprep.subr.bf16.mxu0 0
        %1126 = vmatpush1.bf16.xpose.msra.mxu0 0
        %1127 = vmatprep.subr.bf16.mxu0 0
        %1128 = vmatpush1.bf16.xpose.msra.mxu0 0
        %1129 = vmatprep.subr.bf16.mxu0 0
        %1130 = vmatpush1.bf16.xpose.msra.mxu0 0
        %1131 = vmatprep.mubr.bf16.mxu0 0
        %1132 = vmatmul.mubr.bf16.gmra.mrb[0].mxu0 %v1094
        %v1133 = vpop.f32.mrb[0].mxu0
        %v1134 = vadd.f32 0.0, %v1133
        %v1135 = vpop.f32.mrb[0].mxu0
        %v1136 = vpop.f32.mrb[0].mxu0
        %v1137 = vpop.f32.mrb[0].mxu0
        %1138 = vdwg.mxu0
        %1140 = vrot.lane.b32.xlu0 %v657, 96
        %v1141 = vpop.permute.xlu0 %1140
        %1143 = vrot.lane.b32.xlu0 %v661, 96
        %v1144 = vpop.permute.xlu0 %1143
        %v1146 = vsel %vm668, %v1141, 0
        %v1149 = vsel %vm668, %v1144, 0
        %1151 = vmatprep.subr.bf16.mxu0 0
        %1152 = vmatpush1.bf16.xpose.msra.mxu0 %v1149
        %1153 = vmatprep.subr.bf16.mxu0 0
        %1154 = vmatpush1.bf16.xpose.msra.mxu0 0
        %1155 = vmatprep.subr.bf16.mxu0 0
        %1156 = vmatpush1.bf16.xpose.msra.mxu0 0
        %1157 = vmatprep.subr.bf16.mxu0 0
        %1158 = vmatpush1.bf16.xpose.msra.mxu0 0
        %1159 = vmatprep.subr.bf16.mxu0 0
        %1160 = vmatpush1.bf16.xpose.msra.mxu0 0
        %1161 = vmatprep.subr.bf16.mxu0 0
        %1162 = vmatpush1.bf16.xpose.msra.mxu0 0
        %1163 = vmatprep.subr.bf16.mxu0 0
        %1164 = vmatpush1.bf16.xpose.msra.mxu0 0
        %1165 = vmatprep.subr.bf16.mxu0 0
        %1166 = vmatpush1.bf16.xpose.msra.mxu0 0
        %1167 = vmatprep.subr.bf16.mxu0 0
        %1168 = vmatpush1.bf16.xpose.msra.mxu0 0
        %1169 = vmatprep.subr.bf16.mxu0 0
        %1170 = vmatpush1.bf16.xpose.msra.mxu0 0
        %1171 = vmatprep.subr.bf16.mxu0 0
        %1172 = vmatpush1.bf16.xpose.msra.mxu0 0
        %1173 = vmatprep.subr.bf16.mxu0 0
        %1174 = vmatpush1.bf16.xpose.msra.mxu0 0
        %1175 = vmatprep.subr.bf16.mxu0 0
        %1176 = vmatpush1.bf16.xpose.msra.mxu0 0
        %1177 = vmatprep.subr.bf16.mxu0 0
        %1178 = vmatpush1.bf16.xpose.msra.mxu0 0
        %1179 = vmatprep.subr.bf16.mxu0 0
        %1180 = vmatpush1.bf16.xpose.msra.mxu0 0
        %1181 = vmatprep.subr.bf16.mxu0 0
        %1182 = vmatpush1.bf16.xpose.msra.mxu0 0
        %1183 = vmatprep.mubr.bf16.mxu0 0
        %1184 = vmatmul.mubr.bf16.gmra.mrb[0].mxu0 %v1146
        %v1185 = vpop.f32.mrb[0].mxu0
        %v1186 = vadd.f32 0.0, %v1185
        %v1187 = vpop.f32.mrb[0].mxu0
        %v1188 = vpop.f32.mrb[0].mxu0
        %v1189 = vpop.f32.mrb[0].mxu0
        %1190 = vdwg.mxu0
        %1192 = vrot.lane.b32.xlu0 %v658, 96
        %v1193 = vpop.permute.xlu0 %1192
        %1195 = vrot.lane.b32.xlu0 %v662, 96
        %v1196 = vpop.permute.xlu0 %1195
        %v1198 = vsel %vm668, %v1193, 0
        %v1201 = vsel %vm668, %v1196, 0
        %1203 = vmatprep.subr.bf16.mxu0 0
        %1204 = vmatpush1.bf16.xpose.msra.mxu0 %v1201
        %1205 = vmatprep.subr.bf16.mxu0 0
        %1206 = vmatpush1.bf16.xpose.msra.mxu0 0
        %1207 = vmatprep.subr.bf16.mxu0 0
        %1208 = vmatpush1.bf16.xpose.msra.mxu0 0
        %1209 = vmatprep.subr.bf16.mxu0 0
        %1210 = vmatpush1.bf16.xpose.msra.mxu0 0
        %1211 = vmatprep.subr.bf16.mxu0 0
        %1212 = vmatpush1.bf16.xpose.msra.mxu0 0
        %1213 = vmatprep.subr.bf16.mxu0 0
        %1214 = vmatpush1.bf16.xpose.msra.mxu0 0
        %1215 = vmatprep.subr.bf16.mxu0 0
        %1216 = vmatpush1.bf16.xpose.msra.mxu0 0
        %1217 = vmatprep.subr.bf16.mxu0 0
        %1218 = vmatpush1.bf16.xpose.msra.mxu0 0
        %1219 = vmatprep.subr.bf16.mxu0 0
        %1220 = vmatpush1.bf16.xpose.msra.mxu0 0
        %1221 = vmatprep.subr.bf16.mxu0 0
        %1222 = vmatpush1.bf16.xpose.msra.mxu0 0
        %1223 = vmatprep.subr.bf16.mxu0 0
        %1224 = vmatpush1.bf16.xpose.msra.mxu0 0
        %1225 = vmatprep.subr.bf16.mxu0 0
        %1226 = vmatpush1.bf16.xpose.msra.mxu0 0
        %1227 = vmatprep.subr.bf16.mxu0 0
        %1228 = vmatpush1.bf16.xpose.msra.mxu0 0
        %1229 = vmatprep.subr.bf16.mxu0 0
        %1230 = vmatpush1.bf16.xpose.msra.mxu0 0
        %1231 = vmatprep.subr.bf16.mxu0 0
        %1232 = vmatpush1.bf16.xpose.msra.mxu0 0
        %1233 = vmatprep.subr.bf16.mxu0 0
        %1234 = vmatpush1.bf16.xpose.msra.mxu0 0
        %1235 = vmatprep.mubr.bf16.mxu0 0
        %1236 = vmatmul.mubr.bf16.gmra.mrb[0].mxu0 %v1198
        %v1237 = vpop.f32.mrb[0].mxu0
        %v1238 = vadd.f32 0.0, %v1237
        %v1239 = vpop.f32.mrb[0].mxu0
        %v1240 = vpop.f32.mrb[0].mxu0
        %v1241 = vpop.f32.mrb[0].mxu0
        %1242 = vdwg.mxu0
        %1244 = vrot.lane.b32.xlu0 %v659, 96
        %v1245 = vpop.permute.xlu0 %1244
        %1247 = vrot.lane.b32.xlu0 %v663, 96
        %v1248 = vpop.permute.xlu0 %1247
        %v1250 = vsel %vm668, %v1245, 0
        %v1253 = vsel %vm668, %v1248, 0
        %1255 = vmatprep.subr.bf16.mxu0 0
        %1256 = vmatpush1.bf16.xpose.msra.mxu0 %v1253
        %1257 = vmatprep.subr.bf16.mxu0 0
        %1258 = vmatpush1.bf16.xpose.msra.mxu0 0
        %1259 = vmatprep.subr.bf16.mxu0 0
        %1260 = vmatpush1.bf16.xpose.msra.mxu0 0
        %1261 = vmatprep.subr.bf16.mxu0 0
        %1262 = vmatpush1.bf16.xpose.msra.mxu0 0
        %1263 = vmatprep.subr.bf16.mxu0 0
        %1264 = vmatpush1.bf16.xpose.msra.mxu0 0
        %1265 = vmatprep.subr.bf16.mxu0 0
        %1266 = vmatpush1.bf16.xpose.msra.mxu0 0
        %1267 = vmatprep.subr.bf16.mxu0 0
        %1268 = vmatpush1.bf16.xpose.msra.mxu0 0
        %1269 = vmatprep.subr.bf16.mxu0 0
        %1270 = vmatpush1.bf16.xpose.msra.mxu0 0
        %1271 = vmatprep.subr.bf16.mxu0 0
        %1272 = vmatpush1.bf16.xpose.msra.mxu0 0
        %1273 = vmatprep.subr.bf16.mxu0 0
        %1274 = vmatpush1.bf16.xpose.msra.mxu0 0
        %1275 = vmatprep.subr.bf16.mxu0 0
        %1276 = vmatpush1.bf16.xpose.msra.mxu0 0
        %1277 = vmatprep.subr.bf16.mxu0 0
        %1278 = vmatpush1.bf16.xpose.msra.mxu0 0
        %1279 = vmatprep.subr.bf16.mxu0 0
        %1280 = vmatpush1.bf16.xpose.msra.mxu0 0
        %1281 = vmatprep.subr.bf16.mxu0 0
        %1282 = vmatpush1.bf16.xpose.msra.mxu0 0
        %1283 = vmatprep.subr.bf16.mxu0 0
        %1284 = vmatpush1.bf16.xpose.msra.mxu0 0
        %1285 = vmatprep.subr.bf16.mxu0 0
        %1286 = vmatpush1.bf16.xpose.msra.mxu0 0
        %1287 = vmatprep.mubr.bf16.mxu0 0
        %1288 = vmatmul.mubr.bf16.gmra.mrb[0].mxu0 %v1250
        %v1289 = vpop.f32.mrb[0].mxu0
        %v1290 = vadd.f32 0.0, %v1289
        %v1291 = vpop.f32.mrb[0].mxu0
        %v1292 = vpop.f32.mrb[0].mxu0
        %v1293 = vpop.f32.mrb[0].mxu0
        %1294 = vdwg.mxu0
        %v1295 = vsel %vm853, %v1134, -inf
        %1296 = vmax.xlane.f32.xlu0 %v1295
        %v1297 = vpop.xlane.xlu0 %1296
        %v1298 = vsel %vm853, %v1186, -inf
        %1299 = vmax.xlane.f32.xlu0 %v1298
        %v1300 = vpop.xlane.xlu0 %1299
        %v1301 = vsel %vm853, %v1238, -inf
        %1302 = vmax.xlane.f32.xlu0 %v1301
        %v1303 = vpop.xlane.xlu0 %1302
        %v1304 = vsel %vm853, %v1290, -inf
        %1305 = vmax.xlane.f32.xlu0 %v1304
        %v1306 = vpop.xlane.xlu0 %1305
        %v1307 = vsub.f32 %v1134, %v1297
        %v1308 = vsub.f32 %v1186, %v1300
        %v1309 = vsub.f32 %v1238, %v1303
        %v1310 = vsub.f32 %v1290, %v1306
        %v1311 = vmul.f32 %v1307, 1.442695
        %v1312 = vpow.pop %v1311
        %v1313 = vmul.f32 %v1308, 1.442695
        %v1314 = vpow.pop %v1313
        %v1315 = vmul.f32 %v1309, 1.442695
        %v1316 = vpow.pop %v1315
        %v1317 = vmul.f32 %v1310, 1.442695
        %v1318 = vpow.pop %v1317
        %v1319 = vsel %vm853, %v1312, 0.0
        %1320 = vadd.xlane.f32.xlu0 %v1319
        %v1321 = vpop.xlane.xlu0 %1320
        %v1322 = vsel %vm853, %v1314, 0.0
        %1323 = vadd.xlane.f32.xlu0 %v1322
        %v1324 = vpop.xlane.xlu0 %1323
        %v1325 = vsel %vm853, %v1316, 0.0
        %1326 = vadd.xlane.f32.xlu0 %v1325
        %v1327 = vpop.xlane.xlu0 %1326
        %v1328 = vsel %vm853, %v1318, 0.0
        %1329 = vadd.xlane.f32.xlu0 %v1328
        %v1330 = vpop.xlane.xlu0 %1329
        %v1331 = vrcp.pop %v1321
        %v1332 = vmul.f32 %v1312, %v1331
        %v1333 = vrcp.pop %v1324
        %v1334 = vmul.f32 %v1314, %v1333
        %v1335 = vrcp.pop %v1327
        %v1336 = vmul.f32 %v1316, %v1335
        %v1337 = vrcp.pop %v1330
        %v1338 = vmul.f32 %v1318, %v1337
        %v1339 = vpack.c.bf16 %v1332, %v1332
        %v1340 = vpack.c.bf16 %v1334, %v1334
        %v1341 = vpack.c.bf16 %v1336, %v1336
        %v1342 = vpack.c.bf16 %v1338, %v1338
        %1344 = vrot.lane.b32.xlu0 %v664, 96
        %v1345 = vpop.permute.xlu0 %1344
        %v1347 = vsel %vm853, %v1339, 0
        %v1350 = vsel %vm905, %v1345, 0
        %1352 = vmatprep.subr.bf16.mxu0 0
        %1353 = vmatpush1.bf16.msra.mxu0 %v1350
        %1354 = vmatprep.subr.bf16.mxu0 0
        %1355 = vmatpush1.bf16.msra.mxu0 0
        %1356 = vmatprep.subr.bf16.mxu0 0
        %1357 = vmatpush1.bf16.msra.mxu0 0
        %1358 = vmatprep.subr.bf16.mxu0 0
        %1359 = vmatpush1.bf16.msra.mxu0 0
        %1360 = vmatprep.subr.bf16.mxu0 0
        %1361 = vmatpush1.bf16.msra.mxu0 0
        %1362 = vmatprep.subr.bf16.mxu0 0
        %1363 = vmatpush1.bf16.msra.mxu0 0
        %1364 = vmatprep.subr.bf16.mxu0 0
        %1365 = vmatpush1.bf16.msra.mxu0 0
        %1366 = vmatprep.subr.bf16.mxu0 0
        %1367 = vmatpush1.bf16.msra.mxu0 0
        %1368 = vmatprep.subr.bf16.mxu0 0
        %1369 = vmatpush1.bf16.msra.mxu0 0
        %1370 = vmatprep.subr.bf16.mxu0 0
        %1371 = vmatpush1.bf16.msra.mxu0 0
        %1372 = vmatprep.subr.bf16.mxu0 0
        %1373 = vmatpush1.bf16.msra.mxu0 0
        %1374 = vmatprep.subr.bf16.mxu0 0
        %1375 = vmatpush1.bf16.msra.mxu0 0
        %1376 = vmatprep.subr.bf16.mxu0 0
        %1377 = vmatpush1.bf16.msra.mxu0 0
        %1378 = vmatprep.subr.bf16.mxu0 0
        %1379 = vmatpush1.bf16.msra.mxu0 0
        %1380 = vmatprep.subr.bf16.mxu0 0
        %1381 = vmatpush1.bf16.msra.mxu0 0
        %1382 = vmatprep.subr.bf16.mxu0 0
        %1383 = vmatpush1.bf16.msra.mxu0 0
        %1384 = vmatprep.mubr.bf16.mxu0 0
        %1385 = vmatmul.mubr.bf16.gmra.mrb[0].mxu0 %v1347
        %v1386 = vpop.f32.mrb[0].mxu0
        %v1387 = vadd.f32 0.0, %v1386
        %v1388 = vpop.f32.mrb[0].mxu0
        %v1389 = vpop.f32.mrb[0].mxu0
        %v1390 = vpop.f32.mrb[0].mxu0
        %1391 = vdwg.mxu0
        %1393 = vrot.lane.b32.xlu0 %v665, 96
        %v1394 = vpop.permute.xlu0 %1393
        %v1396 = vsel %vm853, %v1340, 0
        %v1399 = vsel %vm905, %v1394, 0
        %1401 = vmatprep.subr.bf16.mxu0 0
        %1402 = vmatpush1.bf16.msra.mxu0 %v1399
        %1403 = vmatprep.subr.bf16.mxu0 0
        %1404 = vmatpush1.bf16.msra.mxu0 0
        %1405 = vmatprep.subr.bf16.mxu0 0
        %1406 = vmatpush1.bf16.msra.mxu0 0
        %1407 = vmatprep.subr.bf16.mxu0 0
        %1408 = vmatpush1.bf16.msra.mxu0 0
        %1409 = vmatprep.subr.bf16.mxu0 0
        %1410 = vmatpush1.bf16.msra.mxu0 0
        %1411 = vmatprep.subr.bf16.mxu0 0
        %1412 = vmatpush1.bf16.msra.mxu0 0
        %1413 = vmatprep.subr.bf16.mxu0 0
        %1414 = vmatpush1.bf16.msra.mxu0 0
        %1415 = vmatprep.subr.bf16.mxu0 0
        %1416 = vmatpush1.bf16.msra.mxu0 0
        %1417 = vmatprep.subr.bf16.mxu0 0
        %1418 = vmatpush1.bf16.msra.mxu0 0
        %1419 = vmatprep.subr.bf16.mxu0 0
        %1420 = vmatpush1.bf16.msra.mxu0 0
        %1421 = vmatprep.subr.bf16.mxu0 0
        %1422 = vmatpush1.bf16.msra.mxu0 0
        %1423 = vmatprep.subr.bf16.mxu0 0
        %1424 = vmatpush1.bf16.msra.mxu0 0
        %1425 = vmatprep.subr.bf16.mxu0 0
        %1426 = vmatpush1.bf16.msra.mxu0 0
        %1427 = vmatprep.subr.bf16.mxu0 0
        %1428 = vmatpush1.bf16.msra.mxu0 0
        %1429 = vmatprep.subr.bf16.mxu0 0
        %1430 = vmatpush1.bf16.msra.mxu0 0
        %1431 = vmatprep.subr.bf16.mxu0 0
        %1432 = vmatpush1.bf16.msra.mxu0 0
        %1433 = vmatprep.mubr.bf16.mxu0 0
        %1434 = vmatmul.mubr.bf16.gmra.mrb[0].mxu0 %v1396
        %v1435 = vpop.f32.mrb[0].mxu0
        %v1436 = vadd.f32 0.0, %v1435
        %v1437 = vpop.f32.mrb[0].mxu0
        %v1438 = vpop.f32.mrb[0].mxu0
        %v1439 = vpop.f32.mrb[0].mxu0
        %1440 = vdwg.mxu0
        %1442 = vrot.lane.b32.xlu0 %v666, 96
        %v1443 = vpop.permute.xlu0 %1442
        %v1445 = vsel %vm853, %v1341, 0
        %v1448 = vsel %vm905, %v1443, 0
        %1450 = vmatprep.subr.bf16.mxu0 0
        %1451 = vmatpush1.bf16.msra.mxu0 %v1448
        %1452 = vmatprep.subr.bf16.mxu0 0
        %1453 = vmatpush1.bf16.msra.mxu0 0
        %1454 = vmatprep.subr.bf16.mxu0 0
        %1455 = vmatpush1.bf16.msra.mxu0 0
        %1456 = vmatprep.subr.bf16.mxu0 0
        %1457 = vmatpush1.bf16.msra.mxu0 0
        %1458 = vmatprep.subr.bf16.mxu0 0
        %1459 = vmatpush1.bf16.msra.mxu0 0
        %1460 = vmatprep.subr.bf16.mxu0 0
        %1461 = vmatpush1.bf16.msra.mxu0 0
        %1462 = vmatprep.subr.bf16.mxu0 0
        %1463 = vmatpush1.bf16.msra.mxu0 0
        %1464 = vmatprep.subr.bf16.mxu0 0
        %1465 = vmatpush1.bf16.msra.mxu0 0
        %1466 = vmatprep.subr.bf16.mxu0 0
        %1467 = vmatpush1.bf16.msra.mxu0 0
        %1468 = vmatprep.subr.bf16.mxu0 0
        %1469 = vmatpush1.bf16.msra.mxu0 0
        %1470 = vmatprep.subr.bf16.mxu0 0
        %1471 = vmatpush1.bf16.msra.mxu0 0
        %1472 = vmatprep.subr.bf16.mxu0 0
        %1473 = vmatpush1.bf16.msra.mxu0 0
        %1474 = vmatprep.subr.bf16.mxu0 0
        %1475 = vmatpush1.bf16.msra.mxu0 0
        %1476 = vmatprep.subr.bf16.mxu0 0
        %1477 = vmatpush1.bf16.msra.mxu0 0
        %1478 = vmatprep.subr.bf16.mxu0 0
        %1479 = vmatpush1.bf16.msra.mxu0 0
        %1480 = vmatprep.subr.bf16.mxu0 0
        %1481 = vmatpush1.bf16.msra.mxu0 0
        %1482 = vmatprep.mubr.bf16.mxu0 0
        %1483 = vmatmul.mubr.bf16.gmra.mrb[0].mxu0 %v1445
        %v1484 = vpop.f32.mrb[0].mxu0
        %v1485 = vadd.f32 0.0, %v1484
        %v1486 = vpop.f32.mrb[0].mxu0
        %v1487 = vpop.f32.mrb[0].mxu0
        %v1488 = vpop.f32.mrb[0].mxu0
        %1489 = vdwg.mxu0
        %1491 = vrot.lane.b32.xlu0 %v667, 96
        %v1492 = vpop.permute.xlu0 %1491
        %v1494 = vsel %vm853, %v1342, 0
        %v1497 = vsel %vm905, %v1492, 0
        %1499 = vmatprep.subr.bf16.mxu0 0
        %1500 = vmatpush1.bf16.msra.mxu0 %v1497
        %1501 = vmatprep.subr.bf16.mxu0 0
        %1502 = vmatpush1.bf16.msra.mxu0 0
        %1503 = vmatprep.subr.bf16.mxu0 0
        %1504 = vmatpush1.bf16.msra.mxu0 0
        %1505 = vmatprep.subr.bf16.mxu0 0
        %1506 = vmatpush1.bf16.msra.mxu0 0
        %1507 = vmatprep.subr.bf16.mxu0 0
        %1508 = vmatpush1.bf16.msra.mxu0 0
        %1509 = vmatprep.subr.bf16.mxu0 0
        %1510 = vmatpush1.bf16.msra.mxu0 0
        %1511 = vmatprep.subr.bf16.mxu0 0
        %1512 = vmatpush1.bf16.msra.mxu0 0
        %1513 = vmatprep.subr.bf16.mxu0 0
        %1514 = vmatpush1.bf16.msra.mxu0 0
        %1515 = vmatprep.subr.bf16.mxu0 0
        %1516 = vmatpush1.bf16.msra.mxu0 0
        %1517 = vmatprep.subr.bf16.mxu0 0
        %1518 = vmatpush1.bf16.msra.mxu0 0
        %1519 = vmatprep.subr.bf16.mxu0 0
        %1520 = vmatpush1.bf16.msra.mxu0 0
        %1521 = vmatprep.subr.bf16.mxu0 0
        %1522 = vmatpush1.bf16.msra.mxu0 0
        %1523 = vmatprep.subr.bf16.mxu0 0
        %1524 = vmatpush1.bf16.msra.mxu0 0
        %1525 = vmatprep.subr.bf16.mxu0 0
        %1526 = vmatpush1.bf16.msra.mxu0 0
        %1527 = vmatprep.subr.bf16.mxu0 0
        %1528 = vmatpush1.bf16.msra.mxu0 0
        %1529 = vmatprep.subr.bf16.mxu0 0
        %1530 = vmatpush1.bf16.msra.mxu0 0
        %1531 = vmatprep.mubr.bf16.mxu0 0
        %1532 = vmatmul.mubr.bf16.gmra.mrb[0].mxu0 %v1494
        %v1533 = vpop.f32.mrb[0].mxu0
        %v1534 = vadd.f32 0.0, %v1533
        %v1535 = vpop.f32.mrb[0].mxu0
        %v1536 = vpop.f32.mrb[0].mxu0
        %v1537 = vpop.f32.mrb[0].mxu0
        %1538 = vdwg.mxu0
        %1543 = vrot.lane.b32.xlu0 %v1387, 32
        %v1544 = vpop.permute.xlu0 %1543
        %1545 = vrot.lane.b32.xlu0 %v1436, 32
        %v1546 = vpop.permute.xlu0 %1545
        %1547 = vrot.lane.b32.xlu0 %v1485, 32
        %v1548 = vpop.permute.xlu0 %1547
        %1549 = vrot.lane.b32.xlu0 %v1534, 32
        %v1550 = vpop.permute.xlu0 %1549
        %v1555 = vsel %vm668, %v944, %v1544
        %v1556 = vsel %vm668, %v990, %v1546
        %v1557 = vsel %vm668, %v1036, %v1548
        %v1558 = vsel %vm668, %v1082, %v1550
        %v1559 = vpack.c.bf16 %v1556, %v1555
        %v1560 = vpack.c.bf16 %v1558, %v1557
        %v1569 = vunpack.c.l.b16 %v305
        %v1570 = vunpack.c.l.b16 %v306
        %v1571 = vunpack.c.l.b16 %v307
        %v1572 = vunpack.c.l.b16 %v308
        %v1573 = vunpack.c.l.b16 %v309
        %v1574 = vunpack.c.l.b16 %v310
        %v1575 = vunpack.c.l.b16 %v311
        %v1576 = vunpack.c.l.b16 %v312
        %v1577 = vpack.c.b16 %v1570, %v1569
        %v1578 = vpack.c.b16 %v1572, %v1571
        %v1579 = vpack.c.b16 %v1574, %v1573
        %v1580 = vpack.c.b16 %v1576, %v1575
        %vm1585 = vcmask 523264
        %v1587 = vsel %vm1585, %v1559, 0
        %v1590 = vsel %vm1585, %v1560, 0
        %1592 = vmatprep.subr.bf16.mxu0 0
        %1593 = vmatpush1.bf16.msra.mxu0 %v1577
        %1594 = vmatprep.subr.bf16.mxu0 0
        %1595 = vmatpush1.bf16.msra.mxu0 %v1578
        %1596 = vmatprep.subr.bf16.mxu0 0
        %1597 = vmatpush1.bf16.msra.mxu0 %v1579
        %1598 = vmatprep.subr.bf16.mxu0 0
        %1599 = vmatpush1.bf16.msra.mxu0 %v1580
        %1600 = vmatprep.subr.bf16.mxu0 0
        %1601 = vmatpush1.bf16.msra.mxu0 0
        %1602 = vmatprep.subr.bf16.mxu0 0
        %1603 = vmatpush1.bf16.msra.mxu0 0
        %1604 = vmatprep.subr.bf16.mxu0 0
        %1605 = vmatpush1.bf16.msra.mxu0 0
        %1606 = vmatprep.subr.bf16.mxu0 0
        %1607 = vmatpush1.bf16.msra.mxu0 0
        %1608 = vmatprep.subr.bf16.mxu0 0
        %1609 = vmatpush1.bf16.msra.mxu0 0
        %1610 = vmatprep.subr.bf16.mxu0 0
        %1611 = vmatpush1.bf16.msra.mxu0 0
        %1612 = vmatprep.subr.bf16.mxu0 0
        %1613 = vmatpush1.bf16.msra.mxu0 0
        %1614 = vmatprep.subr.bf16.mxu0 0
        %1615 = vmatpush1.bf16.msra.mxu0 0
        %1616 = vmatprep.subr.bf16.mxu0 0
        %1617 = vmatpush1.bf16.msra.mxu0 0
        %1618 = vmatprep.subr.bf16.mxu0 0
        %1619 = vmatpush1.bf16.msra.mxu0 0
        %1620 = vmatprep.subr.bf16.mxu0 0
        %1621 = vmatpush1.bf16.msra.mxu0 0
        %1622 = vmatprep.subr.bf16.mxu0 0
        %1623 = vmatpush1.bf16.msra.mxu0 0
        %1624 = vmatprep.mubr.bf16.mxu0 0
        %1625 = vmatmul.mubr.bf16.gmra.mrb[0].mxu0 %v1587
        %v1626 = vpop.f32.mrb[0].mxu0
        %v1627 = vadd.f32 0.0, %v1626
        %v1628 = vpop.f32.mrb[0].mxu0
        %v1629 = vpop.f32.mrb[0].mxu0
        %v1630 = vadd.f32 0.0, %v1629
        %v1631 = vpop.f32.mrb[0].mxu0
        %1632 = vmatprep.mubr.bf16.mxu0 0
        %1633 = vmatmul.mubr.bf16.gmra.mrb[0].mxu0 %v1590
        %v1634 = vpop.f32.mrb[0].mxu0
        %v1635 = vadd.f32 0.0, %v1634
        %v1636 = vpop.f32.mrb[0].mxu0
        %v1637 = vpop.f32.mrb[0].mxu0
        %v1638 = vadd.f32 0.0, %v1637
        %v1639 = vpop.f32.mrb[0].mxu0
        %1640 = vdwg.mxu0
        %vm1641 = vcmp.ge.f32.partialorder %v1627, 0.0
        %vm1642 = vcmp.ge.f32.partialorder %v1630, 0.0
        %vm1643 = vcmp.ge.f32.partialorder %v1635, 0.0
        %vm1644 = vcmp.ge.f32.partialorder %v1638, 0.0
        %v1645 = vmul.f32 %v1627, 0.2
        %v1646 = vmul.f32 %v1630, 0.2
        %v1647 = vmul.f32 %v1635, 0.2
        %v1648 = vmul.f32 %v1638, 0.2
        %v1649 = vsel %vm1641, %v1627, %v1645
        %v1650 = vsel %vm1642, %v1630, %v1646
        %v1651 = vsel %vm1643, %v1635, %v1647
        %v1652 = vsel %vm1644, %v1638, %v1648
        %v1653 = vadd.f32 %v1649, %v359
        %v1654 = vadd.f32 %v1650, %v360
        %v1655 = vadd.f32 %v1651, %v361
        %v1656 = vadd.f32 %v1652, %v362
        %v1657 = vmul.f32 %v1653, %v358
        %v1658 = vmul.f32 %v1654, %v358
        %v1659 = vmul.f32 %v1655, %v358
        %v1660 = vmul.f32 %v1656, %v358
        %1661 = vadd.xlane.f32.xlu0 %v1657
        %v1662 = vpop.xlane.xlu0 %1661
        %1663 = vadd.xlane.f32.xlu0 %v1658
        %v1664 = vpop.xlane.xlu0 %1663
        %1665 = vadd.xlane.f32.xlu0 %v1659
        %v1666 = vpop.xlane.xlu0 %1665
        %1667 = vadd.xlane.f32.xlu0 %v1660
        %v1668 = vpop.xlane.xlu0 %1667
        %v1669 = vmul.f32 %v1662, 0.015625
        %v1670 = vmul.f32 %v1664, 0.015625
        %v1671 = vmul.f32 %v1666, 0.015625
        %v1672 = vmul.f32 %v1668, 0.015625
        %v1673 = vsub.f32 %v1657, %v1669
        %v1674 = vsub.f32 %v1658, %v1670
        %v1675 = vsub.f32 %v1659, %v1671
        %v1676 = vsub.f32 %v1660, %v1672
        %v1677 = vmul.f32 %v1673, %v358
        %v1678 = vmul.f32 %v1674, %v358
        %v1679 = vmul.f32 %v1675, %v358
        %v1680 = vmul.f32 %v1676, %v358
        %v1681 = vmul.f32 %v1677, %v1677
        %v1682 = vmul.f32 %v1678, %v1678
        %v1683 = vmul.f32 %v1679, %v1679
        %v1684 = vmul.f32 %v1680, %v1680
        %1685 = vadd.xlane.f32.xlu0 %v1681
        %v1686 = vpop.xlane.xlu0 %1685
        %1687 = vadd.xlane.f32.xlu0 %v1682
        %v1688 = vpop.xlane.xlu0 %1687
        %1689 = vadd.xlane.f32.xlu0 %v1683
        %v1690 = vpop.xlane.xlu0 %1689
        %1691 = vadd.xlane.f32.xlu0 %v1684
        %v1692 = vpop.xlane.xlu0 %1691
        %v1693 = vmul.f32 %v1686, 0.015625
        %v1694 = vmul.f32 %v1688, 0.015625
        %v1695 = vmul.f32 %v1690, 0.015625
        %v1696 = vmul.f32 %v1692, 0.015625
        %v1697 = vadd.f32 %v1693, 1e-05
        %v1698 = vadd.f32 %v1694, 1e-05
        %v1699 = vadd.f32 %v1695, 1e-05
        %v1700 = vadd.f32 %v1696, 1e-05
        %v1701 = vrsqrt.pop %v1697
        %v1702 = vrsqrt.pop %v1698
        %v1703 = vrsqrt.pop %v1699
        %v1704 = vrsqrt.pop %v1700
        %v1705 = vmul.f32 %v1677, %v1701
        %v1706 = vmul.f32 %v1678, %v1702
        %v1707 = vmul.f32 %v1679, %v1703
        %v1708 = vmul.f32 %v1680, %v1704
        %v1709 = vlaneseq
        %v1710 = vshrl.u32 %v1709, 7
        %v1711 = vsub.s32 2, %v1710
        %v1712 = vrot.slane %v353, %v1711
        %v1713 = vmul.f32 %v1705, %v1712
        %v1714 = vmul.f32 %v1706, %v1712
        %v1715 = vmul.f32 %v1707, %v1712
        %v1716 = vmul.f32 %v1708, %v1712
        %v1717 = vlaneseq
        %v1718 = vshrl.u32 %v1717, 7
        %v1719 = vsub.s32 3, %v1718
        %v1720 = vrot.slane %v353, %v1719
        %v1721 = vadd.f32 %v1713, %v1720
        %v1722 = vadd.f32 %v1714, %v1720
        %v1723 = vadd.f32 %v1715, %v1720
        %v1724 = vadd.f32 %v1716, %v1720
        %v1725 = vpack.c.bf16 %v1722, %v1721
        %v1726 = vpack.c.bf16 %v1724, %v1723
        %v1727 = vlaneseq
        %v1728 = vshrl.u32 %v1727, 7
        %v1729 = vsub.s32 0, %v1728
        %v1730 = vrot.slane %v353, %v1729
        %v1747 = vunpack.c.l.b16 %v316
        %v1748 = vunpack.c.l.b16 %v317
        %v1749 = vunpack.c.l.b16 %v318
        %v1750 = vunpack.c.l.b16 %v319
        %v1751 = vunpack.c.l.b16 %v320
        %v1752 = vunpack.c.l.b16 %v321
        %v1753 = vunpack.c.l.b16 %v322
        %v1754 = vunpack.c.l.b16 %v323
        %v1755 = vunpack.c.l.b16 %v324
        %v1756 = vunpack.c.l.b16 %v325
        %v1757 = vunpack.c.l.b16 %v326
        %v1758 = vunpack.c.l.b16 %v327
        %v1759 = vunpack.c.l.b16 %v328
        %v1760 = vunpack.c.l.b16 %v329
        %v1761 = vunpack.c.l.b16 %v330
        %v1762 = vunpack.c.l.b16 %v331
        %v1763 = vpack.c.b16 %v1748, %v1747
        %v1764 = vpack.c.b16 %v1750, %v1749
        %v1765 = vpack.c.b16 %v1752, %v1751
        %v1766 = vpack.c.b16 %v1754, %v1753
        %v1767 = vpack.c.b16 %v1756, %v1755
        %v1768 = vpack.c.b16 %v1758, %v1757
        %v1769 = vpack.c.b16 %v1760, %v1759
        %v1770 = vpack.c.b16 %v1762, %v1761
        %1779 = vmatprep.subr.bf16.mxu0 0
        %1780 = vmatpush1.bf16.msra.mxu0 %v1763
        %1781 = vmatprep.subr.bf16.mxu0 0
        %1782 = vmatpush1.bf16.msra.mxu0 %v1764
        %1783 = vmatprep.subr.bf16.mxu0 0
        %1784 = vmatpush1.bf16.msra.mxu0 %v1765
        %1785 = vmatprep.subr.bf16.mxu0 0
        %1786 = vmatpush1.bf16.msra.mxu0 %v1766
        %1787 = vmatprep.subr.bf16.mxu0 0
        %1788 = vmatpush1.bf16.msra.mxu0 %v1767
        %1789 = vmatprep.subr.bf16.mxu0 0
        %1790 = vmatpush1.bf16.msra.mxu0 %v1768
        %1791 = vmatprep.subr.bf16.mxu0 0
        %1792 = vmatpush1.bf16.msra.mxu0 %v1769
        %1793 = vmatprep.subr.bf16.mxu0 0
        %1794 = vmatpush1.bf16.msra.mxu0 %v1770
        %1795 = vmatprep.subr.bf16.mxu0 0
        %1796 = vmatpush1.bf16.msra.mxu0 0
        %1797 = vmatprep.subr.bf16.mxu0 0
        %1798 = vmatpush1.bf16.msra.mxu0 0
        %1799 = vmatprep.subr.bf16.mxu0 0
        %1800 = vmatpush1.bf16.msra.mxu0 0
        %1801 = vmatprep.subr.bf16.mxu0 0
        %1802 = vmatpush1.bf16.msra.mxu0 0
        %1803 = vmatprep.subr.bf16.mxu0 0
        %1804 = vmatpush1.bf16.msra.mxu0 0
        %1805 = vmatprep.subr.bf16.mxu0 0
        %1806 = vmatpush1.bf16.msra.mxu0 0
        %1807 = vmatprep.subr.bf16.mxu0 0
        %1808 = vmatpush1.bf16.msra.mxu0 0
        %1809 = vmatprep.subr.bf16.mxu0 0
        %1810 = vmatpush1.bf16.msra.mxu0 0
        %1811 = vmatprep.mubr.bf16.mxu0 0
        %1812 = vmatmul.mubr.bf16.gmra.mrb[0].mxu0 %v1725
        %v1813 = vpop.f32.mrb[0].mxu0
        %v1814 = vadd.f32 %v1730, %v1813
        %v1815 = vpop.f32.mrb[0].mxu0
        %v1816 = vpop.f32.mrb[0].mxu0
        %v1817 = vadd.f32 %v1730, %v1816
        %v1818 = vpop.f32.mrb[0].mxu0
        %1819 = vmatprep.mubr.bf16.mxu0 0
        %1820 = vmatmul.mubr.bf16.gmra.mrb[0].mxu0 %v1726
        %v1821 = vpop.f32.mrb[0].mxu0
        %v1822 = vadd.f32 %v1730, %v1821
        %v1823 = vpop.f32.mrb[0].mxu0
        %v1824 = vpop.f32.mrb[0].mxu0
        %v1825 = vadd.f32 %v1730, %v1824
        %v1826 = vpop.f32.mrb[0].mxu0
        %1827 = vdwg.mxu0
        %vm1828 = vcmp.ge.f32.partialorder %v1814, 0.0
        %vm1829 = vcmp.ge.f32.partialorder %v1817, 0.0
        %vm1830 = vcmp.ge.f32.partialorder %v1822, 0.0
        %vm1831 = vcmp.ge.f32.partialorder %v1825, 0.0
        %v1832 = vmul.f32 %v1814, 0.2
        %v1833 = vmul.f32 %v1817, 0.2
        %v1834 = vmul.f32 %v1822, 0.2
        %v1835 = vmul.f32 %v1825, 0.2
        %v1836 = vsel %vm1828, %v1814, %v1832
        %v1837 = vsel %vm1829, %v1817, %v1833
        %v1838 = vsel %vm1830, %v1822, %v1834
        %v1839 = vsel %vm1831, %v1825, %v1835
        %v1840 = vpack.c.bf16 %v1837, %v1836
        %v1841 = vpack.c.bf16 %v1839, %v1838
        %v1842 = vlaneseq
        %v1843 = vshrl.u32 %v1842, 7
        %v1844 = vsub.s32 1, %v1843
        %v1845 = vrot.slane %v353, %v1844
        %v1862 = vunpack.c.l.b16 %v335
        %v1863 = vunpack.c.l.b16 %v336
        %v1864 = vunpack.c.l.b16 %v337
        %v1865 = vunpack.c.l.b16 %v338
        %v1866 = vunpack.c.l.b16 %v339
        %v1867 = vunpack.c.l.b16 %v340
        %v1868 = vunpack.c.l.b16 %v341
        %v1869 = vunpack.c.l.b16 %v342
        %v1870 = vunpack.c.l.b16 %v343
        %v1871 = vunpack.c.l.b16 %v344
        %v1872 = vunpack.c.l.b16 %v345
        %v1873 = vunpack.c.l.b16 %v346
        %v1874 = vunpack.c.l.b16 %v347
        %v1875 = vunpack.c.l.b16 %v348
        %v1876 = vunpack.c.l.b16 %v349
        %v1877 = vunpack.c.l.b16 %v350
        %v1878 = vpack.c.b16 %v1863, %v1862
        %v1879 = vpack.c.b16 %v1865, %v1864
        %v1880 = vpack.c.b16 %v1867, %v1866
        %v1881 = vpack.c.b16 %v1869, %v1868
        %v1882 = vpack.c.b16 %v1871, %v1870
        %v1883 = vpack.c.b16 %v1873, %v1872
        %v1884 = vpack.c.b16 %v1875, %v1874
        %v1885 = vpack.c.b16 %v1877, %v1876
        %1894 = vmatprep.subr.bf16.mxu0 0
        %1895 = vmatpush1.bf16.msra.mxu0 %v1878
        %1896 = vmatprep.subr.bf16.mxu0 0
        %1897 = vmatpush1.bf16.msra.mxu0 %v1879
        %1898 = vmatprep.subr.bf16.mxu0 0
        %1899 = vmatpush1.bf16.msra.mxu0 %v1880
        %1900 = vmatprep.subr.bf16.mxu0 0
        %1901 = vmatpush1.bf16.msra.mxu0 %v1881
        %1902 = vmatprep.subr.bf16.mxu0 0
        %1903 = vmatpush1.bf16.msra.mxu0 %v1882
        %1904 = vmatprep.subr.bf16.mxu0 0
        %1905 = vmatpush1.bf16.msra.mxu0 %v1883
        %1906 = vmatprep.subr.bf16.mxu0 0
        %1907 = vmatpush1.bf16.msra.mxu0 %v1884
        %1908 = vmatprep.subr.bf16.mxu0 0
        %1909 = vmatpush1.bf16.msra.mxu0 %v1885
        %1910 = vmatprep.subr.bf16.mxu0 0
        %1911 = vmatpush1.bf16.msra.mxu0 0
        %1912 = vmatprep.subr.bf16.mxu0 0
        %1913 = vmatpush1.bf16.msra.mxu0 0
        %1914 = vmatprep.subr.bf16.mxu0 0
        %1915 = vmatpush1.bf16.msra.mxu0 0
        %1916 = vmatprep.subr.bf16.mxu0 0
        %1917 = vmatpush1.bf16.msra.mxu0 0
        %1918 = vmatprep.subr.bf16.mxu0 0
        %1919 = vmatpush1.bf16.msra.mxu0 0
        %1920 = vmatprep.subr.bf16.mxu0 0
        %1921 = vmatpush1.bf16.msra.mxu0 0
        %1922 = vmatprep.subr.bf16.mxu0 0
        %1923 = vmatpush1.bf16.msra.mxu0 0
        %1924 = vmatprep.subr.bf16.mxu0 0
        %1925 = vmatpush1.bf16.msra.mxu0 0
        %1926 = vmatprep.mubr.bf16.mxu0 0
        %1927 = vmatmul.mubr.bf16.gmra.mrb[0].mxu0 %v1840
        %v1928 = vpop.f32.mrb[0].mxu0
        %v1929 = vadd.f32 %v1845, %v1928
        %v1930 = vpop.f32.mrb[0].mxu0
        %v1931 = vpop.f32.mrb[0].mxu0
        %v1932 = vadd.f32 %v1845, %v1931
        %v1933 = vpop.f32.mrb[0].mxu0
        %1934 = vmatprep.mubr.bf16.mxu0 0
        %1935 = vmatmul.mubr.bf16.gmra.mrb[0].mxu0 %v1841
        %v1936 = vpop.f32.mrb[0].mxu0
        %v1937 = vadd.f32 %v1845, %v1936
        %v1938 = vpop.f32.mrb[0].mxu0
        %v1939 = vpop.f32.mrb[0].mxu0
        %v1940 = vadd.f32 %v1845, %v1939
        %v1941 = vpop.f32.mrb[0].mxu0
        %1942 = vdwg.mxu0
        %v1943 = vadd.f32 %v1721, %v1929
        %v1944 = vadd.f32 %v1722, %v1932
        %v1945 = vadd.f32 %v1723, %v1937
        %v1946 = vadd.f32 %v1724, %v1940
        %v1947 = vmul.f32 %v1943, %v358
        %v1948 = vmul.f32 %v1944, %v358
        %v1949 = vmul.f32 %v1945, %v358
        %v1950 = vmul.f32 %v1946, %v358
        %1951 = vadd.xlane.f32.xlu0 %v1947
        %v1952 = vpop.xlane.xlu0 %1951
        %1953 = vadd.xlane.f32.xlu0 %v1948
        %v1954 = vpop.xlane.xlu0 %1953
        %1955 = vadd.xlane.f32.xlu0 %v1949
        %v1956 = vpop.xlane.xlu0 %1955
        %1957 = vadd.xlane.f32.xlu0 %v1950
        %v1958 = vpop.xlane.xlu0 %1957
        %v1959 = vmul.f32 %v1952, 0.015625
        %v1960 = vmul.f32 %v1954, 0.015625
        %v1961 = vmul.f32 %v1956, 0.015625
        %v1962 = vmul.f32 %v1958, 0.015625
        %v1963 = vsub.f32 %v1947, %v1959
        %v1964 = vsub.f32 %v1948, %v1960
        %v1965 = vsub.f32 %v1949, %v1961
        %v1966 = vsub.f32 %v1950, %v1962
        %v1967 = vmul.f32 %v1963, %v358
        %v1968 = vmul.f32 %v1964, %v358
        %v1969 = vmul.f32 %v1965, %v358
        %v1970 = vmul.f32 %v1966, %v358
        %v1971 = vmul.f32 %v1967, %v1967
        %v1972 = vmul.f32 %v1968, %v1968
        %v1973 = vmul.f32 %v1969, %v1969
        %v1974 = vmul.f32 %v1970, %v1970
        %1975 = vadd.xlane.f32.xlu0 %v1971
        %v1976 = vpop.xlane.xlu0 %1975
        %1977 = vadd.xlane.f32.xlu0 %v1972
        %v1978 = vpop.xlane.xlu0 %1977
        %1979 = vadd.xlane.f32.xlu0 %v1973
        %v1980 = vpop.xlane.xlu0 %1979
        %1981 = vadd.xlane.f32.xlu0 %v1974
        %v1982 = vpop.xlane.xlu0 %1981
        %v1983 = vmul.f32 %v1976, 0.015625
        %v1984 = vmul.f32 %v1978, 0.015625
        %v1985 = vmul.f32 %v1980, 0.015625
        %v1986 = vmul.f32 %v1982, 0.015625
        %v1987 = vadd.f32 %v1983, 1e-05
        %v1988 = vadd.f32 %v1984, 1e-05
        %v1989 = vadd.f32 %v1985, 1e-05
        %v1990 = vadd.f32 %v1986, 1e-05
        %v1991 = vrsqrt.pop %v1987
        %v1992 = vrsqrt.pop %v1988
        %v1993 = vrsqrt.pop %v1989
        %v1994 = vrsqrt.pop %v1990
        %v1995 = vmul.f32 %v1967, %v1991
        %v1996 = vmul.f32 %v1968, %v1992
        %v1997 = vmul.f32 %v1969, %v1993
        %v1998 = vmul.f32 %v1970, %v1994
        %v1999 = vlaneseq
        %v2000 = vshrl.u32 %v1999, 7
        %v2001 = vsub.s32 4, %v2000
        %v2002 = vrot.slane %v353, %v2001
        %v2003 = vmul.f32 %v1995, %v2002
        %v2004 = vmul.f32 %v1996, %v2002
        %v2005 = vmul.f32 %v1997, %v2002
        %v2006 = vmul.f32 %v1998, %v2002
        %v2007 = vlaneseq
        %v2008 = vshrl.u32 %v2007, 7
        %v2009 = vsub.s32 5, %v2008
        %v2010 = vrot.slane %v353, %v2009
        %v2011 = vadd.f32 %v2003, %v2010
        %v2012 = vadd.f32 %v2004, %v2010
        %v2013 = vadd.f32 %v2005, %v2010
        %v2014 = vadd.f32 %v2006, %v2010
        %2015 = vst [vmem:[%s229] sm:$0xff] %v2011
        %2016 = vst [vmem:[%s229 + $0x8] sm:$0xff] %v2012
        %2017 = vst [vmem:[%s229 + $0x10] sm:$0xff] %v2013
        %2018 = vst [vmem:[%s229 + $0x18] sm:$0xff] %v2014
        %s2019 = sand.u32 %s109, 1
        %s2020 = scalar_lea.sflag [#allocation4], %s2019
        %s2021 = sand.u32 %s109, 1
        %s2022 = smul.addr %s2021, 32
        %s2023 = scalar_lea.vmem [#allocation8], %s2022
        // Predicated region
        $region49: #{tpu_custom_call.1} parent=31 // pred_check
          %p2024 = pneg %p119
        $region50: #{tpu_custom_call.1} parent=31 // pred_check_branch
          %2026 = sbr.rel (%p2024) target = $region52
        $region51: #{tpu_custom_call.1} parent=31 // pred_region
          %s2027 = smul.u32 4, %s25
          %s2029 = ssub.s32 512, 512
          %2030 = vsyncadd %s2020, %s2029
          %s2031 = smul.addr %s2027, 128
          %s2032 = scalar_lea.hbm %s3, %s2031
          %s2033 = sshll.u32 %s2023, 4
          %s2034 = int_to_ptr.vmem [resolvable:$true] %s2033
          %2039 = dma.vmem_to_hbm [thread:$0]  %s2034, 512, %s2032, %s2020, 128, 128, 8
        $region52: #{tpu_custom_call.1} parent=31 // pred_fallthru
          _
      $region32: #{tpu_custom_call.1} parent=5 // pred_fallthru
        _
      %p2040 = scmp.le.s32.totalorder 2, %s16
      // Predicated region
      $region53: #{tpu_custom_call.1} parent=5 // pred_check
        %p2041 = pneg %p2040
      $region54: #{tpu_custom_call.1} parent=5 // pred_check_branch
        %2043 = sbr.rel (%p2041) target = $region56
      $region55: #{tpu_custom_call.1} parent=5 // pred_region
        %s2044 = ssub.s32 %s16, 2
        // Predicated region
        $region57: #{tpu_custom_call.1} parent=55 // pred_check
          %p2045 = pneg %p125
        $region58: #{tpu_custom_call.1} parent=55 // pred_check_branch
          %2047 = sbr.rel (%p2045) target = $region60
        $region59: #{tpu_custom_call.1} parent=55 // pred_region
          %s2048 = sand.u32 %s110, 1
          %s2049 = scalar_lea.sflag [#allocation4], %s2048
          %s2050 = sand.u32 %s110, 1
          %s2051 = smul.addr %s2050, 32
          %s2052 = scalar_lea.vmem [#allocation8], %s2051
          %2053 = dma.done %s2049, 512
        $region60: #{tpu_custom_call.1} parent=55 // pred_fallthru
          _
      $region56: #{tpu_custom_call.1} parent=5 // pred_fallthru
        _
    $region6: #{tpu_custom_call.1} parent=1 // loop_footer
      %s20 = sadd.s32 1, %s16
    $region7: #{tpu_custom_call.1} parent=1 // loop_footer_branch
      %15 = sbr.rel target = $region3
    $region8: #{tpu_custom_call.1} parent=1 // loop_exit
      _
    %2054 = vsyncpa [#allocation3], 1
    %s2055 = scalar_lea.sflag [#allocation3], 1
    %2056 = vsyncpa %s2055, 1
    %2057 = vsyncpa [#allocation6], 1
    %2058 = vsyncpa [#allocation4], 1
    %s2059 = scalar_lea.sflag [#allocation4], 1
    %2060 = vsyncpa %s2059, 1

</llo_original>
